<compile_context>
chip_gen: v7x
topology: tpu7x:2x2x1
jax: 0.10.0
libtpu: 0.0.40
codegen_flags: <defaults>
</compile_context>

<pallas_src>
import math

import jax
import jax.numpy as jnp
import numpy as np
from jax import lax
from jax.experimental import pallas as pl
from jax.experimental.pallas import tpu as pltpu

# small-but-consistent config: d_model=32, n_head=4 -> head_dim=8, seq=8, batch=2
B, T, C, H = 2, 8, 32, 4
HD = C // H
BT = B * T
LOG2_T = 3          # T == 8 (power of two; used for cheap batch/row decode)
LN_EPS = 1e-5


# ----------------------------- kernel helpers ------------------------------ #
def _layer_norm(h, w, b):
    # var = E[h^2] - mu^2 so the two lane reductions can overlap on the XLU.
    mu = jnp.mean(h, axis=-1, keepdims=True)
    ms = jnp.mean(h * h, axis=-1, keepdims=True)
    var = ms - mu * mu
    return (h - mu) * lax.rsqrt(var + LN_EPS) * w + b


def _softmax(s):
    s = s - jnp.max(s, axis=-1, keepdims=True)
    p = jnp.exp(s)
    return p * pl.reciprocal(jnp.sum(p, axis=-1, keepdims=True), approx=True)


# --------------------------------- kernel ---------------------------------- #
def decoder_block_kernel(
    x_ref, q_ref, k_ref,
    ln1w_ref, ln1b_ref, w_attn_ref, w_sap_ref,
    ln2w_ref, ln2b_ref, w_ca_ref, w_cap_ref,
    ln3w_ref, ln3b_ref, w1_ref, b1_ref, w2_ref, b2_ref,
    out_ref,
):
    x = x_ref[...]                                   # (B*T, C), batch on sublanes
    scale = 1.0 / math.sqrt(HD)

    # Hoisted additive biases for the batch-folded (BT, BT) score matrices.
    r = lax.broadcasted_iota(jnp.int32, (BT, BT), 0)
    c = lax.broadcasted_iota(jnp.int32, (BT, BT), 1)
    same_b = (r >> LOG2_T) == (c >> LOG2_T)          # same batch block
    causal = (c & (T - 1)) <= (r & (T - 1))          # causal within block
    neg = jnp.float32(-1e30)
    bias_causal = jnp.where(same_b & causal, jnp.float32(0.0), neg)
    bias_block = jnp.where(same_b, jnp.float32(0.0), neg)

    def attention(qa, ka, va, bias):
        # qa/ka/va: (BT, C) with heads on lanes; bias: (BT, BT) additive.
        outs = []
        for h in range(H):
            sl = slice(h * HD, (h + 1) * HD)
            qh, kh, vh = qa[:, sl], ka[:, sl], va[:, sl]       # static lane slices
            s = lax.dot_general(qh, kh, (((1,), (1,)), ((), ())),
                                preferred_element_type=jnp.float32)
            p = _softmax(s * scale + bias)                      # (BT, BT)
            outs.append(jnp.dot(p, vh, preferred_element_type=jnp.float32))
        return jnp.concatenate(outs, axis=1)                    # (BT, C), head-major

    # ---- 1) x = x + causal_self_attn(ln1(x)) ------------------------------ #
    h1 = _layer_norm(x, ln1w_ref[...], ln1b_ref[...])
    qkv = jnp.dot(h1, w_attn_ref[...], preferred_element_type=jnp.float32)   # (BT, 3C)
    y = attention(qkv[:, 0:C], qkv[:, C:2 * C], qkv[:, 2 * C:3 * C], bias_causal)
    x = x + jnp.dot(y, w_sap_ref[...], preferred_element_type=jnp.float32)

    # ---- 2) x = x + cross_attn(ln2(x), q, k)  (v = c_attn(ln2(x))) -------- #
    h2 = _layer_norm(x, ln2w_ref[...], ln2b_ref[...])
    v_ca = jnp.dot(h2, w_ca_ref[...], preferred_element_type=jnp.float32)    # (BT, C)
    y = attention(q_ref[...], k_ref[...], v_ca, bias_block)
    x = x + jnp.dot(y, w_cap_ref[...], preferred_element_type=jnp.float32)

    # ---- 3) x = x + ffwd(ln3(x)) ------------------------------------------ #
    h3 = _layer_norm(x, ln3w_ref[...], ln3b_ref[...])
    f = jnp.dot(h3, w1_ref[...], preferred_element_type=jnp.float32) + b1_ref[...]
    # TODO(synk): PyTorch F.gelu defaults to exact erf-GELU; tanh-approx GELU
    # is used here (erf is not guaranteed to lower in Mosaic).
    f = jax.nn.gelu(f, approximate=True)
    f = jnp.dot(f, w2_ref[...], preferred_element_type=jnp.float32) + b2_ref[...]
    x = x + f

    out_ref[...] = x.astype(out_ref.dtype)


# -------------------------------- wrapper ----------------------------------- #
def decoder_block(x, q, k, params):
    (ln1w, ln1b, w_attn, w_sap, ln2w, ln2b, w_ca, w_cap,
     ln3w, ln3b, w1, b1, w2, b2) = params

    # Fold batch onto sublanes; keep channels (heads) dense on lanes.
    x2 = x.reshape(BT, C)
    q2 = q.reshape(BT, C)
    k2 = k.reshape(BT, C)

    args = (x2, q2, k2,
            ln1w, ln1b, w_attn, w_sap,
            ln2w, ln2b, w_ca, w_cap,
            ln3w, ln3b, w1, b1, w2, b2)

    vmem = pl.BlockSpec(memory_space=pltpu.MemorySpace.VMEM)
    out = pl.pallas_call(
        decoder_block_kernel,
        out_shape=jax.ShapeDtypeStruct((BT, C), x.dtype),
        in_specs=[vmem] * len(args),
        out_specs=vmem,
    )(*args)
    return out.reshape(B, T, C)


# ------------------------------ pure-JAX reference --------------------------- #
def reference(x, q, k, params):
    (ln1w, ln1b, w_attn, w_sap, ln2w, ln2b, w_ca, w_cap,
     ln3w, ln3b, w1, b1, w2, b2) = params

    def ln(h, w, b):
        mu = h.mean(-1, keepdims=True)
        var = ((h - mu) ** 2).mean(-1, keepdims=True)
        return (h - mu) / jnp.sqrt(var + LN_EPS) * w + b

    def mha(qf, kf, vf, causal):
        def split(a):
            return a.reshape(B, T, H, HD).transpose(0, 2, 1, 3)

        qh, kh, vh = split(qf), split(kf), split(vf)
        s = jnp.einsum("bhqd,bhkd->bhqk", qh, kh) / math.sqrt(HD)
        if causal:
            mask = jnp.tril(jnp.ones((T, T), bool))
            s = jnp.where(mask, s, -1e30)
        p = jax.nn.softmax(s, axis=-1)
        o = jnp.einsum("bhqk,bhkd->bhqd", p, vh)
        return o.transpose(0, 2, 1, 3).reshape(B, T, C)

    h1 = ln(x, ln1w[0], ln1b[0])
    qkv = h1 @ w_attn
    x = x + mha(qkv[..., :C], qkv[..., C:2 * C], qkv[..., 2 * C:], True) @ w_sap
    h2 = ln(x, ln2w[0], ln2b[0])
    v2 = h2 @ w_ca
    x = x + mha(q, k, v2, False) @ w_cap
    h3 = ln(x, ln3w[0], ln3b[0])
    f = jax.nn.gelu(h3 @ w1 + b1[0], approximate=True) @ w2 + b2[0]
    return x + f


# ---------------------------------- main ------------------------------------ #
if __name__ == "__main__":
    key = jax.random.PRNGKey(0)
    ks = jax.random.split(key, 12)
    f32 = jnp.float32

    x = jax.random.normal(ks[0], (B, T, C), f32)
    q = jax.random.normal(ks[1], (B, T, C), f32)
    k = jax.random.normal(ks[2], (B, T, C), f32)

    std = 0.02
    # LayerNorm params follow nn.LayerNorm default init (weight=1, bias=0).
    ln1w = jnp.ones((1, C), f32); ln1b = jnp.zeros((1, C), f32)
    ln2w = jnp.ones((1, C), f32); ln2b = jnp.zeros((1, C), f32)
    ln3w = jnp.ones((1, C), f32); ln3b = jnp.zeros((1, C), f32)
    w_attn = std * jax.random.normal(ks[3], (C, 3 * C), f32)   # SelfAttention.attn  (bias=False)
    w_sap  = std * jax.random.normal(ks[4], (C, C), f32)       # SelfAttention.proj  (bias=False)
    w_ca   = std * jax.random.normal(ks[5], (C, C), f32)       # CrossAttention.c_attn (bias=False)
    w_cap  = std * jax.random.normal(ks[6], (C, C), f32)       # CrossAttention.proj (bias=False)
    w1 = std * jax.random.normal(ks[7], (C, 4 * C), f32)       # FeedForward.lin1
    b1 = 0.01 * jax.random.normal(ks[8], (1, 4 * C), f32)
    w2 = std * jax.random.normal(ks[9], (4 * C, C), f32)       # FeedForward.lin2
    b2 = 0.01 * jax.random.normal(ks[10], (1, C), f32)

    params = (ln1w, ln1b, w_attn, w_sap, ln2w, ln2b, w_ca, w_cap,
              ln3w, ln3b, w1, b1, w2, b2)

    out = jax.block_until_ready(decoder_block(x, q, k, params))
    ref = jax.block_until_ready(reference(x, q, k, params))

    # Slightly looser than 1e-4 to absorb the approx-reciprocal softmax
    # (~6e-5 relative in the denominator) and one-pass LN variance.
    np.testing.assert_allclose(np.asarray(out), np.asarray(ref),
                               rtol=2e-4, atol=2e-4)
    print("KERNEL_OK")
</pallas_src>

<mosaic_0001>
module attributes {stable_mosaic.version = 11 : i64} {
  func.func @decoder_block_kernel(%arg0: memref<16x32xf32, #tpu.memory_space<vmem>>, %arg1: memref<16x32xf32, #tpu.memory_space<vmem>>, %arg2: memref<16x32xf32, #tpu.memory_space<vmem>>, %arg3: memref<1x32xf32, #tpu.memory_space<vmem>>, %arg4: memref<1x32xf32, #tpu.memory_space<vmem>>, %arg5: memref<32x96xf32, #tpu.memory_space<vmem>>, %arg6: memref<32x32xf32, #tpu.memory_space<vmem>>, %arg7: memref<1x32xf32, #tpu.memory_space<vmem>>, %arg8: memref<1x32xf32, #tpu.memory_space<vmem>>, %arg9: memref<32x32xf32, #tpu.memory_space<vmem>>, %arg10: memref<32x32xf32, #tpu.memory_space<vmem>>, %arg11: memref<1x32xf32, #tpu.memory_space<vmem>>, %arg12: memref<1x32xf32, #tpu.memory_space<vmem>>, %arg13: memref<32x128xf32, #tpu.memory_space<vmem>>, %arg14: memref<1x128xf32, #tpu.memory_space<vmem>>, %arg15: memref<128x32xf32, #tpu.memory_space<vmem>>, %arg16: memref<1x32xf32, #tpu.memory_space<vmem>>, %arg17: memref<16x32xf32, #tpu.memory_space<vmem>>) attributes {dimension_semantics = [], scalar_prefetch = 0 : i64, scratch_operands = 0 : i64, tpu.core_type = #tpu.core_type<tc>} {
    %c0 = arith.constant 0 : index
    %c0_0 = arith.constant 0 : index
    %0 = vector.load %arg0[%c0, %c0_0] : memref<16x32xf32, #tpu.memory_space<vmem>>, vector<16x32xf32>
    %1 = tpu.iota {dimensions = array<i32: 0>} : vector<16x16xi32>
    %2 = tpu.iota {dimensions = array<i32: 1>} : vector<16x16xi32>
    %c3_i32 = arith.constant 3 : i32
    %3 = vector.broadcast %c3_i32 : i32 to vector<16x16xi32>
    %4 = arith.shrsi %1, %3 : vector<16x16xi32>
    %c3_i32_1 = arith.constant 3 : i32
    %5 = vector.broadcast %c3_i32_1 : i32 to vector<16x16xi32>
    %6 = arith.shrsi %2, %5 : vector<16x16xi32>
    %7 = arith.cmpi eq, %4, %6 : vector<16x16xi32>
    %c7_i32 = arith.constant 7 : i32
    %8 = vector.broadcast %c7_i32 : i32 to vector<16x16xi32>
    %9 = arith.andi %2, %8 : vector<16x16xi32>
    %c7_i32_2 = arith.constant 7 : i32
    %10 = vector.broadcast %c7_i32_2 : i32 to vector<16x16xi32>
    %11 = arith.andi %1, %10 : vector<16x16xi32>
    %12 = arith.cmpi sle, %9, %11 : vector<16x16xi32>
    %13 = arith.andi %7, %12 : vector<16x16xi1>
    %cst = arith.constant 0.000000e+00 : f32
    %cst_3 = arith.constant -1.000000e+30 : f32
    %14 = vector.broadcast %cst : f32 to vector<16x16xf32>
    %15 = vector.broadcast %cst_3 : f32 to vector<16x16xf32>
    %16 = arith.select %13, %14, %15 : vector<16x16xi1>, vector<16x16xf32>
    %cst_4 = arith.constant 0.000000e+00 : f32
    %cst_5 = arith.constant -1.000000e+30 : f32
    %17 = vector.broadcast %cst_4 : f32 to vector<16x16xf32>
    %18 = vector.broadcast %cst_5 : f32 to vector<16x16xf32>
    %19 = arith.select %7, %17, %18 : vector<16x16xi1>, vector<16x16xf32>
    %c0_6 = arith.constant 0 : index
    %c0_7 = arith.constant 0 : index
    %20 = vector.load %arg3[%c0_6, %c0_7] : memref<1x32xf32, #tpu.memory_space<vmem>>, vector<1x32xf32>
    %c0_8 = arith.constant 0 : index
    %c0_9 = arith.constant 0 : index
    %21 = vector.load %arg4[%c0_8, %c0_9] : memref<1x32xf32, #tpu.memory_space<vmem>>, vector<1x32xf32>
    %cst_10 = arith.constant dense<0.000000e+00> : vector<16xf32>
    %22 = vector.multi_reduction <add>, %0, %cst_10 [1] : vector<16x32xf32> to vector<16xf32>
    %23 = vector.shape_cast %22 : vector<16xf32> to vector<16x1xf32>
    %cst_11 = arith.constant 3.200000e+01 : f32
    %24 = vector.broadcast %cst_11 : f32 to vector<16x1xf32>
    %25 = arith.divf %23, %24 : vector<16x1xf32>
    %26 = arith.mulf %0, %0 : vector<16x32xf32>
    %cst_12 = arith.constant dense<0.000000e+00> : vector<16xf32>
    %27 = vector.multi_reduction <add>, %26, %cst_12 [1] : vector<16x32xf32> to vector<16xf32>
    %28 = vector.shape_cast %27 : vector<16xf32> to vector<16x1xf32>
    %cst_13 = arith.constant 3.200000e+01 : f32
    %29 = vector.broadcast %cst_13 : f32 to vector<16x1xf32>
    %30 = arith.divf %28, %29 : vector<16x1xf32>
    %31 = arith.mulf %25, %25 : vector<16x1xf32>
    %32 = arith.subf %30, %31 : vector<16x1xf32>
    %33 = vector.broadcast %25 : vector<16x1xf32> to vector<16x32xf32>
    %34 = arith.subf %0, %33 : vector<16x32xf32>
    %cst_14 = arith.constant 9.99999974E-6 : f32
    %35 = vector.broadcast %cst_14 : f32 to vector<16x1xf32>
    %36 = arith.addf %32, %35 : vector<16x1xf32>
    %37 = math.rsqrt %36 : vector<16x1xf32>
    %38 = vector.broadcast %37 : vector<16x1xf32> to vector<16x32xf32>
    %39 = arith.mulf %34, %38 : vector<16x32xf32>
    %40 = vector.broadcast %20 : vector<1x32xf32> to vector<16x32xf32>
    %41 = arith.mulf %39, %40 : vector<16x32xf32>
    %42 = vector.broadcast %21 : vector<1x32xf32> to vector<16x32xf32>
    %43 = arith.addf %41, %42 : vector<16x32xf32>
    %c0_15 = arith.constant 0 : index
    %c0_16 = arith.constant 0 : index
    %44 = vector.load %arg5[%c0_15, %c0_16] : memref<32x96xf32, #tpu.memory_space<vmem>>, vector<32x96xf32>
    %cst_17 = arith.constant dense<0.000000e+00> : vector<16x96xf32>
    %45 = tpu.matmul %43, %44, %cst_17 {dimension_numbers = #tpu.dot_dimension_numbers<[1], [0], [0], [1], [0, 0, 1, 1], [], []>} : vector<16x32xf32>, vector<32x96xf32>, vector<16x96xf32> -> vector<16x96xf32>
    %46 = vector.extract_strided_slice %45 {offsets = [0, 0], sizes = [16, 32], strides = [1, 1]} : vector<16x96xf32> to vector<16x32xf32>
    %47 = vector.extract_strided_slice %45 {offsets = [0, 32], sizes = [16, 32], strides = [1, 1]} : vector<16x96xf32> to vector<16x32xf32>
    %48 = vector.extract_strided_slice %45 {offsets = [0, 64], sizes = [16, 32], strides = [1, 1]} : vector<16x96xf32> to vector<16x32xf32>
    %49 = vector.extract_strided_slice %46 {offsets = [0, 0], sizes = [16, 8], strides = [1, 1]} : vector<16x32xf32> to vector<16x8xf32>
    %50 = vector.extract_strided_slice %47 {offsets = [0, 0], sizes = [16, 8], strides = [1, 1]} : vector<16x32xf32> to vector<16x8xf32>
    %51 = vector.extract_strided_slice %48 {offsets = [0, 0], sizes = [16, 8], strides = [1, 1]} : vector<16x32xf32> to vector<16x8xf32>
    %cst_18 = arith.constant dense<0.000000e+00> : vector<16x16xf32>
    %52 = tpu.matmul %49, %50, %cst_18 {dimension_numbers = #tpu.dot_dimension_numbers<[1], [1], [0], [0], [0, 0, 1, 0], [], []>} : vector<16x8xf32>, vector<16x8xf32>, vector<16x16xf32> -> vector<16x16xf32>
    %cst_19 = arith.constant 0.353553385 : f32
    %53 = vector.broadcast %cst_19 : f32 to vector<16x16xf32>
    %54 = arith.mulf %52, %53 : vector<16x16xf32>
    %55 = arith.addf %54, %16 : vector<16x16xf32>
    %cst_20 = arith.constant dense<0xFF800000> : vector<16xf32>
    %56 = vector.multi_reduction <maximumf>, %55, %cst_20 [1] : vector<16x16xf32> to vector<16xf32>
    %57 = vector.shape_cast %56 : vector<16xf32> to vector<16x1xf32>
    %58 = vector.broadcast %57 : vector<16x1xf32> to vector<16x16xf32>
    %59 = arith.subf %55, %58 : vector<16x16xf32>
    %60 = math.exp %59 : vector<16x16xf32>
    %cst_21 = arith.constant dense<0.000000e+00> : vector<16xf32>
    %61 = vector.multi_reduction <add>, %60, %cst_21 [1] : vector<16x16xf32> to vector<16xf32>
    %62 = vector.shape_cast %61 : vector<16xf32> to vector<16x1xf32>
    %63 = tpu.reciprocal %62 {approx = true} : vector<16x1xf32> -> vector<16x1xf32>
    %64 = vector.broadcast %63 : vector<16x1xf32> to vector<16x16xf32>
    %65 = arith.mulf %60, %64 : vector<16x16xf32>
    %cst_22 = arith.constant dense<0.000000e+00> : vector<16x8xf32>
    %66 = tpu.matmul %65, %51, %cst_22 {dimension_numbers = #tpu.dot_dimension_numbers<[1], [0], [0], [1], [0, 0, 1, 1], [], []>} : vector<16x16xf32>, vector<16x8xf32>, vector<16x8xf32> -> vector<16x8xf32>
    %67 = vector.extract_strided_slice %46 {offsets = [0, 8], sizes = [16, 8], strides = [1, 1]} : vector<16x32xf32> to vector<16x8xf32>
    %68 = vector.extract_strided_slice %47 {offsets = [0, 8], sizes = [16, 8], strides = [1, 1]} : vector<16x32xf32> to vector<16x8xf32>
    %69 = vector.extract_strided_slice %48 {offsets = [0, 8], sizes = [16, 8], strides = [1, 1]} : vector<16x32xf32> to vector<16x8xf32>
    %cst_23 = arith.constant dense<0.000000e+00> : vector<16x16xf32>
    %70 = tpu.matmul %67, %68, %cst_23 {dimension_numbers = #tpu.dot_dimension_numbers<[1], [1], [0], [0], [0, 0, 1, 0], [], []>} : vector<16x8xf32>, vector<16x8xf32>, vector<16x16xf32> -> vector<16x16xf32>
    %cst_24 = arith.constant 0.353553385 : f32
    %71 = vector.broadcast %cst_24 : f32 to vector<16x16xf32>
    %72 = arith.mulf %70, %71 : vector<16x16xf32>
    %73 = arith.addf %72, %16 : vector<16x16xf32>
    %cst_25 = arith.constant dense<0xFF800000> : vector<16xf32>
    %74 = vector.multi_reduction <maximumf>, %73, %cst_25 [1] : vector<16x16xf32> to vector<16xf32>
    %75 = vector.shape_cast %74 : vector<16xf32> to vector<16x1xf32>
    %76 = vector.broadcast %75 : vector<16x1xf32> to vector<16x16xf32>
    %77 = arith.subf %73, %76 : vector<16x16xf32>
    %78 = math.exp %77 : vector<16x16xf32>
    %cst_26 = arith.constant dense<0.000000e+00> : vector<16xf32>
    %79 = vector.multi_reduction <add>, %78, %cst_26 [1] : vector<16x16xf32> to vector<16xf32>
    %80 = vector.shape_cast %79 : vector<16xf32> to vector<16x1xf32>
    %81 = tpu.reciprocal %80 {approx = true} : vector<16x1xf32> -> vector<16x1xf32>
    %82 = vector.broadcast %81 : vector<16x1xf32> to vector<16x16xf32>
    %83 = arith.mulf %78, %82 : vector<16x16xf32>
    %cst_27 = arith.constant dense<0.000000e+00> : vector<16x8xf32>
    %84 = tpu.matmul %83, %69, %cst_27 {dimension_numbers = #tpu.dot_dimension_numbers<[1], [0], [0], [1], [0, 0, 1, 1], [], []>} : vector<16x16xf32>, vector<16x8xf32>, vector<16x8xf32> -> vector<16x8xf32>
    %85 = vector.extract_strided_slice %46 {offsets = [0, 16], sizes = [16, 8], strides = [1, 1]} : vector<16x32xf32> to vector<16x8xf32>
    %86 = vector.extract_strided_slice %47 {offsets = [0, 16], sizes = [16, 8], strides = [1, 1]} : vector<16x32xf32> to vector<16x8xf32>
    %87 = vector.extract_strided_slice %48 {offsets = [0, 16], sizes = [16, 8], strides = [1, 1]} : vector<16x32xf32> to vector<16x8xf32>
    %cst_28 = arith.constant dense<0.000000e+00> : vector<16x16xf32>
    %88 = tpu.matmul %85, %86, %cst_28 {dimension_numbers = #tpu.dot_dimension_numbers<[1], [1], [0], [0], [0, 0, 1, 0], [], []>} : vector<16x8xf32>, vector<16x8xf32>, vector<16x16xf32> -> vector<16x16xf32>
    %cst_29 = arith.constant 0.353553385 : f32
    %89 = vector.broadcast %cst_29 : f32 to vector<16x16xf32>
    %90 = arith.mulf %88, %89 : vector<16x16xf32>
    %91 = arith.addf %90, %16 : vector<16x16xf32>
    %cst_30 = arith.constant dense<0xFF800000> : vector<16xf32>
    %92 = vector.multi_reduction <maximumf>, %91, %cst_30 [1] : vector<16x16xf32> to vector<16xf32>
    %93 = vector.shape_cast %92 : vector<16xf32> to vector<16x1xf32>
    %94 = vector.broadcast %93 : vector<16x1xf32> to vector<16x16xf32>
    %95 = arith.subf %91, %94 : vector<16x16xf32>
    %96 = math.exp %95 : vector<16x16xf32>
    %cst_31 = arith.constant dense<0.000000e+00> : vector<16xf32>
    %97 = vector.multi_reduction <add>, %96, %cst_31 [1] : vector<16x16xf32> to vector<16xf32>
    %98 = vector.shape_cast %97 : vector<16xf32> to vector<16x1xf32>
    %99 = tpu.reciprocal %98 {approx = true} : vector<16x1xf32> -> vector<16x1xf32>
    %100 = vector.broadcast %99 : vector<16x1xf32> to vector<16x16xf32>
    %101 = arith.mulf %96, %100 : vector<16x16xf32>
    %cst_32 = arith.constant dense<0.000000e+00> : vector<16x8xf32>
    %102 = tpu.matmul %101, %87, %cst_32 {dimension_numbers = #tpu.dot_dimension_numbers<[1], [0], [0], [1], [0, 0, 1, 1], [], []>} : vector<16x16xf32>, vector<16x8xf32>, vector<16x8xf32> -> vector<16x8xf32>
    %103 = vector.extract_strided_slice %46 {offsets = [0, 24], sizes = [16, 8], strides = [1, 1]} : vector<16x32xf32> to vector<16x8xf32>
    %104 = vector.extract_strided_slice %47 {offsets = [0, 24], sizes = [16, 8], strides = [1, 1]} : vector<16x32xf32> to vector<16x8xf32>
    %105 = vector.extract_strided_slice %48 {offsets = [0, 24], sizes = [16, 8], strides = [1, 1]} : vector<16x32xf32> to vector<16x8xf32>
    %cst_33 = arith.constant dense<0.000000e+00> : vector<16x16xf32>
    %106 = tpu.matmul %103, %104, %cst_33 {dimension_numbers = #tpu.dot_dimension_numbers<[1], [1], [0], [0], [0, 0, 1, 0], [], []>} : vector<16x8xf32>, vector<16x8xf32>, vector<16x16xf32> -> vector<16x16xf32>
    %cst_34 = arith.constant 0.353553385 : f32
    %107 = vector.broadcast %cst_34 : f32 to vector<16x16xf32>
    %108 = arith.mulf %106, %107 : vector<16x16xf32>
    %109 = arith.addf %108, %16 : vector<16x16xf32>
    %cst_35 = arith.constant dense<0xFF800000> : vector<16xf32>
    %110 = vector.multi_reduction <maximumf>, %109, %cst_35 [1] : vector<16x16xf32> to vector<16xf32>
    %111 = vector.shape_cast %110 : vector<16xf32> to vector<16x1xf32>
    %112 = vector.broadcast %111 : vector<16x1xf32> to vector<16x16xf32>
    %113 = arith.subf %109, %112 : vector<16x16xf32>
    %114 = math.exp %113 : vector<16x16xf32>
    %cst_36 = arith.constant dense<0.000000e+00> : vector<16xf32>
    %115 = vector.multi_reduction <add>, %114, %cst_36 [1] : vector<16x16xf32> to vector<16xf32>
    %116 = vector.shape_cast %115 : vector<16xf32> to vector<16x1xf32>
    %117 = tpu.reciprocal %116 {approx = true} : vector<16x1xf32> -> vector<16x1xf32>
    %118 = vector.broadcast %117 : vector<16x1xf32> to vector<16x16xf32>
    %119 = arith.mulf %114, %118 : vector<16x16xf32>
    %cst_37 = arith.constant dense<0.000000e+00> : vector<16x8xf32>
    %120 = tpu.matmul %119, %105, %cst_37 {dimension_numbers = #tpu.dot_dimension_numbers<[1], [0], [0], [1], [0, 0, 1, 1], [], []>} : vector<16x16xf32>, vector<16x8xf32>, vector<16x8xf32> -> vector<16x8xf32>
    %121 = tpu.concatenate %66, %84, %102, %120 in 1 : vector<16x8xf32>, vector<16x8xf32>, vector<16x8xf32>, vector<16x8xf32> -> vector<16x32xf32>
    %c0_38 = arith.constant 0 : index
    %c0_39 = arith.constant 0 : index
    %122 = vector.load %arg6[%c0_38, %c0_39] : memref<32x32xf32, #tpu.memory_space<vmem>>, vector<32x32xf32>
    %cst_40 = arith.constant dense<0.000000e+00> : vector<16x32xf32>
    %123 = tpu.matmul %121, %122, %cst_40 {dimension_numbers = #tpu.dot_dimension_numbers<[1], [0], [0], [1], [0, 0, 1, 1], [], []>} : vector<16x32xf32>, vector<32x32xf32>, vector<16x32xf32> -> vector<16x32xf32>
    %124 = arith.addf %0, %123 : vector<16x32xf32>
    %c0_41 = arith.constant 0 : index
    %c0_42 = arith.constant 0 : index
    %125 = vector.load %arg7[%c0_41, %c0_42] : memref<1x32xf32, #tpu.memory_space<vmem>>, vector<1x32xf32>
    %c0_43 = arith.constant 0 : index
    %c0_44 = arith.constant 0 : index
    %126 = vector.load %arg8[%c0_43, %c0_44] : memref<1x32xf32, #tpu.memory_space<vmem>>, vector<1x32xf32>
    %cst_45 = arith.constant dense<0.000000e+00> : vector<16xf32>
    %127 = vector.multi_reduction <add>, %124, %cst_45 [1] : vector<16x32xf32> to vector<16xf32>
    %128 = vector.shape_cast %127 : vector<16xf32> to vector<16x1xf32>
    %cst_46 = arith.constant 3.200000e+01 : f32
    %129 = vector.broadcast %cst_46 : f32 to vector<16x1xf32>
    %130 = arith.divf %128, %129 : vector<16x1xf32>
    %131 = arith.mulf %124, %124 : vector<16x32xf32>
    %cst_47 = arith.constant dense<0.000000e+00> : vector<16xf32>
    %132 = vector.multi_reduction <add>, %131, %cst_47 [1] : vector<16x32xf32> to vector<16xf32>
    %133 = vector.shape_cast %132 : vector<16xf32> to vector<16x1xf32>
    %cst_48 = arith.constant 3.200000e+01 : f32
    %134 = vector.broadcast %cst_48 : f32 to vector<16x1xf32>
    %135 = arith.divf %133, %134 : vector<16x1xf32>
    %136 = arith.mulf %130, %130 : vector<16x1xf32>
    %137 = arith.subf %135, %136 : vector<16x1xf32>
    %138 = vector.broadcast %130 : vector<16x1xf32> to vector<16x32xf32>
    %139 = arith.subf %124, %138 : vector<16x32xf32>
    %cst_49 = arith.constant 9.99999974E-6 : f32
    %140 = vector.broadcast %cst_49 : f32 to vector<16x1xf32>
    %141 = arith.addf %137, %140 : vector<16x1xf32>
    %142 = math.rsqrt %141 : vector<16x1xf32>
    %143 = vector.broadcast %142 : vector<16x1xf32> to vector<16x32xf32>
    %144 = arith.mulf %139, %143 : vector<16x32xf32>
    %145 = vector.broadcast %125 : vector<1x32xf32> to vector<16x32xf32>
    %146 = arith.mulf %144, %145 : vector<16x32xf32>
    %147 = vector.broadcast %126 : vector<1x32xf32> to vector<16x32xf32>
    %148 = arith.addf %146, %147 : vector<16x32xf32>
    %c0_50 = arith.constant 0 : index
    %c0_51 = arith.constant 0 : index
    %149 = vector.load %arg9[%c0_50, %c0_51] : memref<32x32xf32, #tpu.memory_space<vmem>>, vector<32x32xf32>
    %cst_52 = arith.constant dense<0.000000e+00> : vector<16x32xf32>
    %150 = tpu.matmul %148, %149, %cst_52 {dimension_numbers = #tpu.dot_dimension_numbers<[1], [0], [0], [1], [0, 0, 1, 1], [], []>} : vector<16x32xf32>, vector<32x32xf32>, vector<16x32xf32> -> vector<16x32xf32>
    %c0_53 = arith.constant 0 : index
    %c0_54 = arith.constant 0 : index
    %151 = vector.load %arg1[%c0_53, %c0_54] : memref<16x32xf32, #tpu.memory_space<vmem>>, vector<16x32xf32>
    %c0_55 = arith.constant 0 : index
    %c0_56 = arith.constant 0 : index
    %152 = vector.load %arg2[%c0_55, %c0_56] : memref<16x32xf32, #tpu.memory_space<vmem>>, vector<16x32xf32>
    %153 = vector.extract_strided_slice %151 {offsets = [0, 0], sizes = [16, 8], strides = [1, 1]} : vector<16x32xf32> to vector<16x8xf32>
    %154 = vector.extract_strided_slice %152 {offsets = [0, 0], sizes = [16, 8], strides = [1, 1]} : vector<16x32xf32> to vector<16x8xf32>
    %155 = vector.extract_strided_slice %150 {offsets = [0, 0], sizes = [16, 8], strides = [1, 1]} : vector<16x32xf32> to vector<16x8xf32>
    %cst_57 = arith.constant dense<0.000000e+00> : vector<16x16xf32>
    %156 = tpu.matmul %153, %154, %cst_57 {dimension_numbers = #tpu.dot_dimension_numbers<[1], [1], [0], [0], [0, 0, 1, 0], [], []>} : vector<16x8xf32>, vector<16x8xf32>, vector<16x16xf32> -> vector<16x16xf32>
    %cst_58 = arith.constant 0.353553385 : f32
    %157 = vector.broadcast %cst_58 : f32 to vector<16x16xf32>
    %158 = arith.mulf %156, %157 : vector<16x16xf32>
    %159 = arith.addf %158, %19 : vector<16x16xf32>
    %cst_59 = arith.constant dense<0xFF800000> : vector<16xf32>
    %160 = vector.multi_reduction <maximumf>, %159, %cst_59 [1] : vector<16x16xf32> to vector<16xf32>
    %161 = vector.shape_cast %160 : vector<16xf32> to vector<16x1xf32>
    %162 = vector.broadcast %161 : vector<16x1xf32> to vector<16x16xf32>
    %163 = arith.subf %159, %162 : vector<16x16xf32>
    %164 = math.exp %163 : vector<16x16xf32>
    %cst_60 = arith.constant dense<0.000000e+00> : vector<16xf32>
    %165 = vector.multi_reduction <add>, %164, %cst_60 [1] : vector<16x16xf32> to vector<16xf32>
    %166 = vector.shape_cast %165 : vector<16xf32> to vector<16x1xf32>
    %167 = tpu.reciprocal %166 {approx = true} : vector<16x1xf32> -> vector<16x1xf32>
    %168 = vector.broadcast %167 : vector<16x1xf32> to vector<16x16xf32>
    %169 = arith.mulf %164, %168 : vector<16x16xf32>
    %cst_61 = arith.constant dense<0.000000e+00> : vector<16x8xf32>
    %170 = tpu.matmul %169, %155, %cst_61 {dimension_numbers = #tpu.dot_dimension_numbers<[1], [0], [0], [1], [0, 0, 1, 1], [], []>} : vector<16x16xf32>, vector<16x8xf32>, vector<16x8xf32> -> vector<16x8xf32>
    %171 = vector.extract_strided_slice %151 {offsets = [0, 8], sizes = [16, 8], strides = [1, 1]} : vector<16x32xf32> to vector<16x8xf32>
    %172 = vector.extract_strided_slice %152 {offsets = [0, 8], sizes = [16, 8], strides = [1, 1]} : vector<16x32xf32> to vector<16x8xf32>
    %173 = vector.extract_strided_slice %150 {offsets = [0, 8], sizes = [16, 8], strides = [1, 1]} : vector<16x32xf32> to vector<16x8xf32>
    %cst_62 = arith.constant dense<0.000000e+00> : vector<16x16xf32>
    %174 = tpu.matmul %171, %172, %cst_62 {dimension_numbers = #tpu.dot_dimension_numbers<[1], [1], [0], [0], [0, 0, 1, 0], [], []>} : vector<16x8xf32>, vector<16x8xf32>, vector<16x16xf32> -> vector<16x16xf32>
    %cst_63 = arith.constant 0.353553385 : f32
    %175 = vector.broadcast %cst_63 : f32 to vector<16x16xf32>
    %176 = arith.mulf %174, %175 : vector<16x16xf32>
    %177 = arith.addf %176, %19 : vector<16x16xf32>
    %cst_64 = arith.constant dense<0xFF800000> : vector<16xf32>
    %178 = vector.multi_reduction <maximumf>, %177, %cst_64 [1] : vector<16x16xf32> to vector<16xf32>
    %179 = vector.shape_cast %178 : vector<16xf32> to vector<16x1xf32>
    %180 = vector.broadcast %179 : vector<16x1xf32> to vector<16x16xf32>
    %181 = arith.subf %177, %180 : vector<16x16xf32>
    %182 = math.exp %181 : vector<16x16xf32>
    %cst_65 = arith.constant dense<0.000000e+00> : vector<16xf32>
    %183 = vector.multi_reduction <add>, %182, %cst_65 [1] : vector<16x16xf32> to vector<16xf32>
    %184 = vector.shape_cast %183 : vector<16xf32> to vector<16x1xf32>
    %185 = tpu.reciprocal %184 {approx = true} : vector<16x1xf32> -> vector<16x1xf32>
    %186 = vector.broadcast %185 : vector<16x1xf32> to vector<16x16xf32>
    %187 = arith.mulf %182, %186 : vector<16x16xf32>
    %cst_66 = arith.constant dense<0.000000e+00> : vector<16x8xf32>
    %188 = tpu.matmul %187, %173, %cst_66 {dimension_numbers = #tpu.dot_dimension_numbers<[1], [0], [0], [1], [0, 0, 1, 1], [], []>} : vector<16x16xf32>, vector<16x8xf32>, vector<16x8xf32> -> vector<16x8xf32>
    %189 = vector.extract_strided_slice %151 {offsets = [0, 16], sizes = [16, 8], strides = [1, 1]} : vector<16x32xf32> to vector<16x8xf32>
    %190 = vector.extract_strided_slice %152 {offsets = [0, 16], sizes = [16, 8], strides = [1, 1]} : vector<16x32xf32> to vector<16x8xf32>
    %191 = vector.extract_strided_slice %150 {offsets = [0, 16], sizes = [16, 8], strides = [1, 1]} : vector<16x32xf32> to vector<16x8xf32>
    %cst_67 = arith.constant dense<0.000000e+00> : vector<16x16xf32>
    %192 = tpu.matmul %189, %190, %cst_67 {dimension_numbers = #tpu.dot_dimension_numbers<[1], [1], [0], [0], [0, 0, 1, 0], [], []>} : vector<16x8xf32>, vector<16x8xf32>, vector<16x16xf32> -> vector<16x16xf32>
    %cst_68 = arith.constant 0.353553385 : f32
    %193 = vector.broadcast %cst_68 : f32 to vector<16x16xf32>
    %194 = arith.mulf %192, %193 : vector<16x16xf32>
    %195 = arith.addf %194, %19 : vector<16x16xf32>
    %cst_69 = arith.constant dense<0xFF800000> : vector<16xf32>
    %196 = vector.multi_reduction <maximumf>, %195, %cst_69 [1] : vector<16x16xf32> to vector<16xf32>
    %197 = vector.shape_cast %196 : vector<16xf32> to vector<16x1xf32>
    %198 = vector.broadcast %197 : vector<16x1xf32> to vector<16x16xf32>
    %199 = arith.subf %195, %198 : vector<16x16xf32>
    %200 = math.exp %199 : vector<16x16xf32>
    %cst_70 = arith.constant dense<0.000000e+00> : vector<16xf32>
    %201 = vector.multi_reduction <add>, %200, %cst_70 [1] : vector<16x16xf32> to vector<16xf32>
    %202 = vector.shape_cast %201 : vector<16xf32> to vector<16x1xf32>
    %203 = tpu.reciprocal %202 {approx = true} : vector<16x1xf32> -> vector<16x1xf32>
    %204 = vector.broadcast %203 : vector<16x1xf32> to vector<16x16xf32>
    %205 = arith.mulf %200, %204 : vector<16x16xf32>
    %cst_71 = arith.constant dense<0.000000e+00> : vector<16x8xf32>
    %206 = tpu.matmul %205, %191, %cst_71 {dimension_numbers = #tpu.dot_dimension_numbers<[1], [0], [0], [1], [0, 0, 1, 1], [], []>} : vector<16x16xf32>, vector<16x8xf32>, vector<16x8xf32> -> vector<16x8xf32>
    %207 = vector.extract_strided_slice %151 {offsets = [0, 24], sizes = [16, 8], strides = [1, 1]} : vector<16x32xf32> to vector<16x8xf32>
    %208 = vector.extract_strided_slice %152 {offsets = [0, 24], sizes = [16, 8], strides = [1, 1]} : vector<16x32xf32> to vector<16x8xf32>
    %209 = vector.extract_strided_slice %150 {offsets = [0, 24], sizes = [16, 8], strides = [1, 1]} : vector<16x32xf32> to vector<16x8xf32>
    %cst_72 = arith.constant dense<0.000000e+00> : vector<16x16xf32>
    %210 = tpu.matmul %207, %208, %cst_72 {dimension_numbers = #tpu.dot_dimension_numbers<[1], [1], [0], [0], [0, 0, 1, 0], [], []>} : vector<16x8xf32>, vector<16x8xf32>, vector<16x16xf32> -> vector<16x16xf32>
    %cst_73 = arith.constant 0.353553385 : f32
    %211 = vector.broadcast %cst_73 : f32 to vector<16x16xf32>
    %212 = arith.mulf %210, %211 : vector<16x16xf32>
    %213 = arith.addf %212, %19 : vector<16x16xf32>
    %cst_74 = arith.constant dense<0xFF800000> : vector<16xf32>
    %214 = vector.multi_reduction <maximumf>, %213, %cst_74 [1] : vector<16x16xf32> to vector<16xf32>
    %215 = vector.shape_cast %214 : vector<16xf32> to vector<16x1xf32>
    %216 = vector.broadcast %215 : vector<16x1xf32> to vector<16x16xf32>
    %217 = arith.subf %213, %216 : vector<16x16xf32>
    %218 = math.exp %217 : vector<16x16xf32>
    %cst_75 = arith.constant dense<0.000000e+00> : vector<16xf32>
    %219 = vector.multi_reduction <add>, %218, %cst_75 [1] : vector<16x16xf32> to vector<16xf32>
    %220 = vector.shape_cast %219 : vector<16xf32> to vector<16x1xf32>
    %221 = tpu.reciprocal %220 {approx = true} : vector<16x1xf32> -> vector<16x1xf32>
    %222 = vector.broadcast %221 : vector<16x1xf32> to vector<16x16xf32>
    %223 = arith.mulf %218, %222 : vector<16x16xf32>
    %cst_76 = arith.constant dense<0.000000e+00> : vector<16x8xf32>
    %224 = tpu.matmul %223, %209, %cst_76 {dimension_numbers = #tpu.dot_dimension_numbers<[1], [0], [0], [1], [0, 0, 1, 1], [], []>} : vector<16x16xf32>, vector<16x8xf32>, vector<16x8xf32> -> vector<16x8xf32>
    %225 = tpu.concatenate %170, %188, %206, %224 in 1 : vector<16x8xf32>, vector<16x8xf32>, vector<16x8xf32>, vector<16x8xf32> -> vector<16x32xf32>
    %c0_77 = arith.constant 0 : index
    %c0_78 = arith.constant 0 : index
    %226 = vector.load %arg10[%c0_77, %c0_78] : memref<32x32xf32, #tpu.memory_space<vmem>>, vector<32x32xf32>
    %cst_79 = arith.constant dense<0.000000e+00> : vector<16x32xf32>
    %227 = tpu.matmul %225, %226, %cst_79 {dimension_numbers = #tpu.dot_dimension_numbers<[1], [0], [0], [1], [0, 0, 1, 1], [], []>} : vector<16x32xf32>, vector<32x32xf32>, vector<16x32xf32> -> vector<16x32xf32>
    %228 = arith.addf %124, %227 : vector<16x32xf32>
    %c0_80 = arith.constant 0 : index
    %c0_81 = arith.constant 0 : index
    %229 = vector.load %arg11[%c0_80, %c0_81] : memref<1x32xf32, #tpu.memory_space<vmem>>, vector<1x32xf32>
    %c0_82 = arith.constant 0 : index
    %c0_83 = arith.constant 0 : index
    %230 = vector.load %arg12[%c0_82, %c0_83] : memref<1x32xf32, #tpu.memory_space<vmem>>, vector<1x32xf32>
    %cst_84 = arith.constant dense<0.000000e+00> : vector<16xf32>
    %231 = vector.multi_reduction <add>, %228, %cst_84 [1] : vector<16x32xf32> to vector<16xf32>
    %232 = vector.shape_cast %231 : vector<16xf32> to vector<16x1xf32>
    %cst_85 = arith.constant 3.200000e+01 : f32
    %233 = vector.broadcast %cst_85 : f32 to vector<16x1xf32>
    %234 = arith.divf %232, %233 : vector<16x1xf32>
    %235 = arith.mulf %228, %228 : vector<16x32xf32>
    %cst_86 = arith.constant dense<0.000000e+00> : vector<16xf32>
    %236 = vector.multi_reduction <add>, %235, %cst_86 [1] : vector<16x32xf32> to vector<16xf32>
    %237 = vector.shape_cast %236 : vector<16xf32> to vector<16x1xf32>
    %cst_87 = arith.constant 3.200000e+01 : f32
    %238 = vector.broadcast %cst_87 : f32 to vector<16x1xf32>
    %239 = arith.divf %237, %238 : vector<16x1xf32>
    %240 = arith.mulf %234, %234 : vector<16x1xf32>
    %241 = arith.subf %239, %240 : vector<16x1xf32>
    %242 = vector.broadcast %234 : vector<16x1xf32> to vector<16x32xf32>
    %243 = arith.subf %228, %242 : vector<16x32xf32>
    %cst_88 = arith.constant 9.99999974E-6 : f32
    %244 = vector.broadcast %cst_88 : f32 to vector<16x1xf32>
    %245 = arith.addf %241, %244 : vector<16x1xf32>
    %246 = math.rsqrt %245 : vector<16x1xf32>
    %247 = vector.broadcast %246 : vector<16x1xf32> to vector<16x32xf32>
    %248 = arith.mulf %243, %247 : vector<16x32xf32>
    %249 = vector.broadcast %229 : vector<1x32xf32> to vector<16x32xf32>
    %250 = arith.mulf %248, %249 : vector<16x32xf32>
    %251 = vector.broadcast %230 : vector<1x32xf32> to vector<16x32xf32>
    %252 = arith.addf %250, %251 : vector<16x32xf32>
    %c0_89 = arith.constant 0 : index
    %c0_90 = arith.constant 0 : index
    %253 = vector.load %arg13[%c0_89, %c0_90] : memref<32x128xf32, #tpu.memory_space<vmem>>, vector<32x128xf32>
    %cst_91 = arith.constant dense<0.000000e+00> : vector<16x128xf32>
    %254 = tpu.matmul %252, %253, %cst_91 {dimension_numbers = #tpu.dot_dimension_numbers<[1], [0], [0], [1], [0, 0, 1, 1], [], []>} : vector<16x32xf32>, vector<32x128xf32>, vector<16x128xf32> -> vector<16x128xf32>
    %c0_92 = arith.constant 0 : index
    %c0_93 = arith.constant 0 : index
    %255 = vector.load %arg14[%c0_92, %c0_93] : memref<1x128xf32, #tpu.memory_space<vmem>>, vector<1x128xf32>
    %256 = vector.broadcast %255 : vector<1x128xf32> to vector<16x128xf32>
    %257 = arith.addf %254, %256 : vector<16x128xf32>
    %258 = arith.mulf %257, %257 : vector<16x128xf32>
    %259 = arith.mulf %257, %258 : vector<16x128xf32>
    %cst_94 = arith.constant 4.471500e-02 : f32
    %260 = vector.broadcast %cst_94 : f32 to vector<16x128xf32>
    %261 = arith.mulf %260, %259 : vector<16x128xf32>
    %262 = arith.addf %257, %261 : vector<16x128xf32>
    %cst_95 = arith.constant 0.797884583 : f32
    %263 = vector.broadcast %cst_95 : f32 to vector<16x128xf32>
    %264 = arith.mulf %263, %262 : vector<16x128xf32>
    %265 = math.tanh %264 : vector<16x128xf32>
    %cst_96 = arith.constant 1.000000e+00 : f32
    %266 = vector.broadcast %cst_96 : f32 to vector<16x128xf32>
    %267 = arith.addf %266, %265 : vector<16x128xf32>
    %cst_97 = arith.constant 5.000000e-01 : f32
    %268 = vector.broadcast %cst_97 : f32 to vector<16x128xf32>
    %269 = arith.mulf %268, %267 : vector<16x128xf32>
    %270 = arith.mulf %257, %269 : vector<16x128xf32>
    %c0_98 = arith.constant 0 : index
    %c0_99 = arith.constant 0 : index
    %271 = vector.load %arg15[%c0_98, %c0_99] : memref<128x32xf32, #tpu.memory_space<vmem>>, vector<128x32xf32>
    %cst_100 = arith.constant dense<0.000000e+00> : vector<16x32xf32>
    %272 = tpu.matmul %270, %271, %cst_100 {dimension_numbers = #tpu.dot_dimension_numbers<[1], [0], [0], [1], [0, 0, 1, 1], [], []>} : vector<16x128xf32>, vector<128x32xf32>, vector<16x32xf32> -> vector<16x32xf32>
    %c0_101 = arith.constant 0 : index
    %c0_102 = arith.constant 0 : index
    %273 = vector.load %arg16[%c0_101, %c0_102] : memref<1x32xf32, #tpu.memory_space<vmem>>, vector<1x32xf32>
    %274 = vector.broadcast %273 : vector<1x32xf32> to vector<16x32xf32>
    %275 = arith.addf %272, %274 : vector<16x32xf32>
    %276 = arith.addf %228, %275 : vector<16x32xf32>
    %c0_103 = arith.constant 0 : index
    %c0_104 = arith.constant 0 : index
    %277 = vector.load %arg17[%c0_103, %c0_104] : memref<16x32xf32, #tpu.memory_space<vmem>>, vector<16x32xf32>
    tpu.vector_store %arg17[%c0_103, %c0_104], %276 {strides = array<i32>} : memref<16x32xf32, #tpu.memory_space<vmem>>, vector<16x32xf32>,
    return
  }
}

</mosaic_0001>

<llo_original>
// kernel: tpu_custom_call.1
$region0: #{tpu_custom_call.1}
  #allocation0 [shape = 'u32[]', space=smem, size = 0x4, offset = 0x4, fixed_abs, tag = 'smem constant byte address 0x4 - core index']
  #allocation1 [shape = 'u32[144,128]{1,0:T(1,128)}', space=vmem, size = 0x12000, scoped, tag = 'internal scratch']
  %s0 = inlined_call_operand.hbm [shape: f32[16,32], index: 0, kind: input, shape index: {}]
  %s1 = inlined_call_operand.hbm [shape: f32[16,32], index: 1, kind: input, shape index: {}]
  %s2 = inlined_call_operand.hbm [shape: f32[16,32], index: 2, kind: input, shape index: {}]
  %s3 = inlined_call_operand.vmem [shape: f32[1,32], index: 3, kind: input, shape index: {}]
  %s4 = inlined_call_operand.vmem [shape: f32[1,32], index: 4, kind: input, shape index: {}]
  %s5 = inlined_call_operand.vmem [shape: f32[32,96], index: 5, kind: input, shape index: {}]
  %s6 = inlined_call_operand.vmem [shape: f32[32,32], index: 6, kind: input, shape index: {}]
  %s7 = inlined_call_operand.vmem [shape: f32[1,32], index: 7, kind: input, shape index: {}]
  %s8 = inlined_call_operand.vmem [shape: f32[1,32], index: 8, kind: input, shape index: {}]
  %s9 = inlined_call_operand.vmem [shape: f32[32,32], index: 9, kind: input, shape index: {}]
  %s10 = inlined_call_operand.vmem [shape: f32[32,32], index: 10, kind: input, shape index: {}]
  %s11 = inlined_call_operand.vmem [shape: f32[1,32], index: 11, kind: input, shape index: {}]
  %s12 = inlined_call_operand.vmem [shape: f32[1,32], index: 12, kind: input, shape index: {}]
  %s13 = inlined_call_operand.vmem [shape: f32[32,128], index: 13, kind: input, shape index: {}]
  %s14 = inlined_call_operand.vmem [shape: f32[1,128], index: 14, kind: input, shape index: {}]
  %s15 = inlined_call_operand.vmem [shape: f32[128,32], index: 15, kind: input, shape index: {}]
  %s16 = inlined_call_operand.vmem [shape: f32[1,32], index: 16, kind: input, shape index: {}]
  %s17 = inlined_call_operand.hbm [shape: f32[16,32], index: 17, kind: output, shape index: {}]
  %s18 = sld [smem:[#allocation0]]
  $region90: #{tpu_custom_call.1} parent=0
    _
  %s20 = ssub.s32 1, %s18
  %s21 = scalar_select 0, %s20, %s18
  $region1: #{tpu_custom_call.1} parent=0
    #allocation2 [shape = 'u8[8192]{0}', space=vmem, size = 0x2000, scoped, tag = 'input window, operand 0, single buffered']
    #allocation3 [shape = 's32[1]{0}', space=sflag, size = 0x4, scoped, tag = 'scoped memory for tpu_custom_call.1']
    #allocation4 [shape = 's32[1]{0}', space=sflag, size = 0x4, scoped, tag = 'scoped memory for tpu_custom_call.1']
    #allocation5 [shape = 'u8[8192]{0}', space=vmem, size = 0x2000, scoped, tag = 'input window, operand 1, single buffered']
    #allocation6 [shape = 's32[1]{0}', space=sflag, size = 0x4, scoped, tag = 'scoped memory for tpu_custom_call.1']
    #allocation7 [shape = 'u8[8192]{0}', space=vmem, size = 0x2000, scoped, tag = 'input window, operand 2, single buffered']
    #allocation8 [shape = 'u8[8192]{0}', space=vmem, size = 0x2000, scoped, tag = 'output window, operand 0, single buffered']
    %22 = vsyncpa [#allocation3], 0
    %23 = vsyncpa [#allocation6], 0
    %24 = vsyncpa [#allocation4], 0
    // Predicated region
    $region2: #{tpu_custom_call.1} parent=1 // pred_check
      _
    $region3: #{tpu_custom_call.1} parent=1 // pred_check_branch
      %26 = sbr.rel (0) target = $region5
    $region4: #{tpu_custom_call.1} parent=1 // pred_region
      %s28 = ssub.s32 256, 256
      %29 = vsyncadd [#allocation3], %s28
      %s30 = sshll.u32 [#allocation2], 4
      %s31 = int_to_ptr.vmem [resolvable:$true] %s30
      %36 = dma.hbm_to_vmem [thread:$0]  %s0, 256, %s31, [#allocation3], 128, 128, 8
    $region5: #{tpu_custom_call.1} parent=1 // pred_fallthru
      _
    // Predicated region
    $region6: #{tpu_custom_call.1} parent=1 // pred_check
      _
    $region7: #{tpu_custom_call.1} parent=1 // pred_check_branch
      %38 = sbr.rel (0) target = $region9
    $region8: #{tpu_custom_call.1} parent=1 // pred_region
      %s40 = ssub.s32 256, 256
      %41 = vsyncadd [#allocation6], %s40
      %s42 = sshll.u32 [#allocation5], 4
      %s43 = int_to_ptr.vmem [resolvable:$true] %s42
      %48 = dma.hbm_to_vmem [thread:$0]  %s1, 256, %s43, [#allocation6], 128, 128, 8
    $region9: #{tpu_custom_call.1} parent=1 // pred_fallthru
      _
    // Predicated region
    $region10: #{tpu_custom_call.1} parent=1 // pred_check
      _
    $region11: #{tpu_custom_call.1} parent=1 // pred_check_branch
      %50 = sbr.rel (0) target = $region13
    $region12: #{tpu_custom_call.1} parent=1 // pred_region
      %s52 = ssub.s32 256, 256
      %53 = vsyncadd [#allocation6], %s52
      %s54 = sshll.u32 [#allocation7], 4
      %s55 = int_to_ptr.vmem [resolvable:$true] %s54
      %60 = dma.hbm_to_vmem [thread:$0]  %s2, 256, %s55, [#allocation6], 128, 128, 8
    $region13: #{tpu_custom_call.1} parent=1 // pred_fallthru
      _
    // Predicated region
    $region14: #{tpu_custom_call.1} parent=1 // pred_check
      _
    $region15: #{tpu_custom_call.1} parent=1 // pred_check_branch
      %62 = sbr.rel (0) target = $region17
    $region16: #{tpu_custom_call.1} parent=1 // pred_region
      _
    $region17: #{tpu_custom_call.1} parent=1 // pred_fallthru
      _
    // Predicated region
    $region18: #{tpu_custom_call.1} parent=1 // pred_check
      _
    $region19: #{tpu_custom_call.1} parent=1 // pred_check_branch
      %64 = sbr.rel (0) target = $region21
    $region20: #{tpu_custom_call.1} parent=1 // pred_region
      _
    $region21: #{tpu_custom_call.1} parent=1 // pred_fallthru
      _
    // Predicated region
    $region22: #{tpu_custom_call.1} parent=1 // pred_check
      _
    $region23: #{tpu_custom_call.1} parent=1 // pred_check_branch
      %66 = sbr.rel (0) target = $region25
    $region24: #{tpu_custom_call.1} parent=1 // pred_region
      _
    $region25: #{tpu_custom_call.1} parent=1 // pred_fallthru
      _
    // Predicated region
    $region26: #{tpu_custom_call.1} parent=1 // pred_check
      _
    $region27: #{tpu_custom_call.1} parent=1 // pred_check_branch
      %68 = sbr.rel (0) target = $region29
    $region28: #{tpu_custom_call.1} parent=1 // pred_region
      _
    $region29: #{tpu_custom_call.1} parent=1 // pred_fallthru
      _
    // Predicated region
    $region30: #{tpu_custom_call.1} parent=1 // pred_check
      _
    $region31: #{tpu_custom_call.1} parent=1 // pred_check_branch
      %70 = sbr.rel (0) target = $region33
    $region32: #{tpu_custom_call.1} parent=1 // pred_region
      _
    $region33: #{tpu_custom_call.1} parent=1 // pred_fallthru
      _
    // Predicated region
    $region34: #{tpu_custom_call.1} parent=1 // pred_check
      _
    $region35: #{tpu_custom_call.1} parent=1 // pred_check_branch
      %72 = sbr.rel (0) target = $region37
    $region36: #{tpu_custom_call.1} parent=1 // pred_region
      _
    $region37: #{tpu_custom_call.1} parent=1 // pred_fallthru
      _
    // Predicated region
    $region38: #{tpu_custom_call.1} parent=1 // pred_check
      _
    $region39: #{tpu_custom_call.1} parent=1 // pred_check_branch
      %74 = sbr.rel (0) target = $region41
    $region40: #{tpu_custom_call.1} parent=1 // pred_region
      _
    $region41: #{tpu_custom_call.1} parent=1 // pred_fallthru
      _
    // Predicated region
    $region42: #{tpu_custom_call.1} parent=1 // pred_check
      _
    $region43: #{tpu_custom_call.1} parent=1 // pred_check_branch
      %76 = sbr.rel (0) target = $region45
    $region44: #{tpu_custom_call.1} parent=1 // pred_region
      _
    $region45: #{tpu_custom_call.1} parent=1 // pred_fallthru
      _
    // Predicated region
    $region46: #{tpu_custom_call.1} parent=1 // pred_check
      _
    $region47: #{tpu_custom_call.1} parent=1 // pred_check_branch
      %78 = sbr.rel (0) target = $region49
    $region48: #{tpu_custom_call.1} parent=1 // pred_region
      _
    $region49: #{tpu_custom_call.1} parent=1 // pred_fallthru
      _
    // Predicated region
    $region50: #{tpu_custom_call.1} parent=1 // pred_check
      _
    $region51: #{tpu_custom_call.1} parent=1 // pred_check_branch
      %80 = sbr.rel (0) target = $region53
    $region52: #{tpu_custom_call.1} parent=1 // pred_region
      _
    $region53: #{tpu_custom_call.1} parent=1 // pred_fallthru
      _
    // Predicated region
    $region54: #{tpu_custom_call.1} parent=1 // pred_check
      _
    $region55: #{tpu_custom_call.1} parent=1 // pred_check_branch
      %82 = sbr.rel (0) target = $region57
    $region56: #{tpu_custom_call.1} parent=1 // pred_region
      _
    $region57: #{tpu_custom_call.1} parent=1 // pred_fallthru
      _
    // Predicated region
    $region58: #{tpu_custom_call.1} parent=1 // pred_check
      _
    $region59: #{tpu_custom_call.1} parent=1 // pred_check_branch
      %84 = sbr.rel (0) target = $region61
    $region60: #{tpu_custom_call.1} parent=1 // pred_region
      _
    $region61: #{tpu_custom_call.1} parent=1 // pred_fallthru
      _
    // Predicated region
    $region62: #{tpu_custom_call.1} parent=1 // pred_check
      _
    $region63: #{tpu_custom_call.1} parent=1 // pred_check_branch
      %86 = sbr.rel (0) target = $region65
    $region64: #{tpu_custom_call.1} parent=1 // pred_region
      _
    $region65: #{tpu_custom_call.1} parent=1 // pred_fallthru
      _
    // Predicated region
    $region66: #{tpu_custom_call.1} parent=1 // pred_check
      _
    $region67: #{tpu_custom_call.1} parent=1 // pred_check_branch
      %88 = sbr.rel (0) target = $region69
    $region68: #{tpu_custom_call.1} parent=1 // pred_region
      _
    $region69: #{tpu_custom_call.1} parent=1 // pred_fallthru
      _
    // Predicated region
    $region70: #{tpu_custom_call.1} parent=1 // pred_check
      _
    $region71: #{tpu_custom_call.1} parent=1 // pred_check_branch
      %90 = sbr.rel (0) target = $region73
    $region72: #{tpu_custom_call.1} parent=1 // pred_region
      %91 = dma.done [#allocation3], 256
    $region73: #{tpu_custom_call.1} parent=1 // pred_fallthru
      _
    // Predicated region
    $region74: #{tpu_custom_call.1} parent=1 // pred_check
      _
    $region75: #{tpu_custom_call.1} parent=1 // pred_check_branch
      %93 = sbr.rel (0) target = $region77
    $region76: #{tpu_custom_call.1} parent=1 // pred_region
      %94 = dma.done [#allocation6], 256
    $region77: #{tpu_custom_call.1} parent=1 // pred_fallthru
      _
    // Predicated region
    $region78: #{tpu_custom_call.1} parent=1 // pred_check
      _
    $region79: #{tpu_custom_call.1} parent=1 // pred_check_branch
      %96 = sbr.rel (0) target = $region81
    $region80: #{tpu_custom_call.1} parent=1 // pred_region
      %97 = dma.done [#allocation6], 256
    $region81: #{tpu_custom_call.1} parent=1 // pred_fallthru
      _
    %v98 = vld [vmem:[#allocation2] sm:$0xff]
    %v99 = vld [vmem:[#allocation2 + $0x8] sm:$0xff]
    %v100 = vlaneseq
    %v101 = vshrl.u32 %v100, 7
    %v102 = vadd.s32 %v101, 8
    %v103 = vlaneseq
    %v104 = vand.u32 %v103, 127
    %v105 = vshra.s32 %v101, 3
    %v106 = vshra.s32 %v102, 3
    %v107 = vshra.s32 %v104, 3
    %vm108 = vcmp.eq.s32.totalorder %v105, %v107
    %vm109 = vcmp.eq.s32.totalorder %v106, %v107
    %v110 = vand.u32 %v104, 7
    %v111 = vand.u32 %v101, 7
    %v112 = vand.u32 %v102, 7
    %vm113 = vcmp.le.s32.totalorder %v110, %v111
    %vm114 = vcmp.le.s32.totalorder %v110, %v112
    %vm115 = vmand %vm108, %vm113
    %vm116 = vmand %vm109, %vm114
    %v117 = vsel %vm115, 0.0, -1e+30
    %v118 = vsel %vm116, 0.0, -1e+30
    %v119 = vsel %vm108, 0.0, -1e+30
    %v120 = vsel %vm109, 0.0, -1e+30
    %v121 = vld [vmem:[%s3] sm:$0x1]
    %v122 = vld [vmem:[%s4] sm:$0x1]
    %vm123 = vcmask 261120
    %v124 = vsel %vm123, %v98, 0.0
    %125 = vadd.xlane.f32.xlu0 %v124
    %v126 = vpop.xlane.xlu0 %125
    %v127 = vsel %vm123, %v99, 0.0
    %128 = vadd.xlane.f32.xlu0 %v127
    %v129 = vpop.xlane.xlu0 %128
    %v130 = vrcp.pop 32.0
    %v131 = vmul.f32 %v126, %v130
    %v132 = vmul.f32 %v129, %v130
    %v133 = vmul.f32 %v98, %v98
    %v134 = vmul.f32 %v99, %v99
    %v135 = vsel %vm123, %v133, 0.0
    %136 = vadd.xlane.f32.xlu0 %v135
    %v137 = vpop.xlane.xlu0 %136
    %v138 = vsel %vm123, %v134, 0.0
    %139 = vadd.xlane.f32.xlu0 %v138
    %v140 = vpop.xlane.xlu0 %139
    %v141 = vmul.f32 %v137, %v130
    %v142 = vmul.f32 %v140, %v130
    %v143 = vmul.f32 %v131, %v131
    %v144 = vmul.f32 %v132, %v132
    %v145 = vsub.f32 %v141, %v143
    %v146 = vsub.f32 %v142, %v144
    %v147 = vsub.f32 %v98, %v131
    %v148 = vsub.f32 %v99, %v132
    %v149 = vadd.f32 %v145, 1e-05
    %v150 = vadd.f32 %v146, 1e-05
    %v151 = vrsqrt.pop %v149
    %v152 = vrsqrt.pop %v150
    %v153 = vmul.f32 %v147, %v151
    %v154 = vmul.f32 %v148, %v152
    %v156 = vlaneseq
    %v157 = vshrl.u32 %v156, 7
    %v158 = vsub.s32 0, %v157
    %v159 = vrot.slane %v121, %v158
    %v161 = vmul.f32 %v153, %v159
    %v162 = vmul.f32 %v154, %v159
    %v164 = vlaneseq
    %v165 = vshrl.u32 %v164, 7
    %v166 = vsub.s32 0, %v165
    %v167 = vrot.slane %v122, %v166
    %v169 = vadd.f32 %v161, %v167
    %v170 = vadd.f32 %v162, %v167
    %v171 = vld [vmem:[%s5] sm:$0xff]
    %v172 = vld [vmem:[%s5 + $0x8] sm:$0xff]
    %v173 = vld [vmem:[%s5 + $0x10] sm:$0xff]
    %v174 = vld [vmem:[%s5 + $0x18] sm:$0xff]
    %v176 = vsel %vm123, %v169, 0
    %v179 = vsel %vm123, %v170, 0
    %181 = vmatprep.subr.mxu0 0.0
    %182 = vmatpush1.msra.mxu0 %v171
    %183 = vmatprep.subr.mxu0 0.0
    %184 = vmatpush1.msra.mxu0 %v172
    %185 = vmatprep.subr.mxu0 0.0
    %186 = vmatpush1.msra.mxu0 %v173
    %187 = vmatprep.subr.mxu0 0.0
    %188 = vmatpush1.msra.mxu0 %v174
    %189 = vmatprep.subr.mxu0 0.0
    %190 = vmatpush1.msra.mxu0 0.0
    %191 = vmatprep.subr.mxu0 0.0
    %192 = vmatpush1.msra.mxu0 0.0
    %193 = vmatprep.subr.mxu0 0.0
    %194 = vmatpush1.msra.mxu0 0.0
    %195 = vmatprep.subr.mxu0 0.0
    %196 = vmatpush1.msra.mxu0 0.0
    %197 = vmatprep.subr.mxu0 0.0
    %198 = vmatpush1.msra.mxu0 0.0
    %199 = vmatprep.subr.mxu0 0.0
    %200 = vmatpush1.msra.mxu0 0.0
    %201 = vmatprep.subr.mxu0 0.0
    %202 = vmatpush1.msra.mxu0 0.0
    %203 = vmatprep.subr.mxu0 0.0
    %204 = vmatpush1.msra.mxu0 0.0
    %205 = vmatprep.subr.mxu0 0.0
    %206 = vmatpush1.msra.mxu0 0.0
    %207 = vmatprep.subr.mxu0 0.0
    %208 = vmatpush1.msra.mxu0 0.0
    %209 = vmatprep.subr.mxu0 0.0
    %210 = vmatpush1.msra.mxu0 0.0
    %211 = vmatprep.subr.mxu0 0.0
    %212 = vmatpush1.msra.mxu0 0.0
    %213 = vmatprep.subr.mxu0 0.0
    %214 = vmatpush1.msra.mxu0 0.0
    %215 = vmatprep.subr.mxu0 0.0
    %216 = vmatpush1.msra.mxu0 0.0
    %217 = vmatprep.subr.mxu0 0.0
    %218 = vmatpush1.msra.mxu0 0.0
    %219 = vmatprep.subr.mxu0 0.0
    %220 = vmatpush1.msra.mxu0 0.0
    %221 = vmatprep.subr.mxu0 0.0
    %222 = vmatpush1.msra.mxu0 0.0
    %223 = vmatprep.subr.mxu0 0.0
    %224 = vmatpush1.msra.mxu0 0.0
    %225 = vmatprep.subr.mxu0 0.0
    %226 = vmatpush1.msra.mxu0 0.0
    %227 = vmatprep.subr.mxu0 0.0
    %228 = vmatpush1.msra.mxu0 0.0
    %229 = vmatprep.subr.mxu0 0.0
    %230 = vmatpush1.msra.mxu0 0.0
    %231 = vmatprep.subr.mxu0 0.0
    %232 = vmatpush1.msra.mxu0 0.0
    %233 = vmatprep.subr.mxu0 0.0
    %234 = vmatpush1.msra.mxu0 0.0
    %235 = vmatprep.subr.mxu0 0.0
    %236 = vmatpush1.msra.mxu0 0.0
    %237 = vmatprep.subr.mxu0 0.0
    %238 = vmatpush1.msra.mxu0 0.0
    %239 = vmatprep.subr.mxu0 0.0
    %240 = vmatpush1.msra.mxu0 0.0
    %241 = vmatprep.subr.mxu0 0.0
    %242 = vmatpush1.msra.mxu0 0.0
    %243 = vmatprep.subr.mxu0 0.0
    %244 = vmatpush1.msra.mxu0 0.0
    %245 = vmatprep.mubr.f32.mxu0 0.0
    %246 = vmatmul.mubr.f32.gmra.mrb[0].mxu0 %v176
    %v247 = vpop.f32.mrb[0].mxu0
    %v248 = vadd.f32 0.0, %v247
    %v249 = vpop.f32.mrb[0].mxu0
    %250 = vmatprep.mubr.f32.mxu0 0.0
    %251 = vmatmul.mubr.f32.gmra.mrb[0].mxu0 %v179
    %v252 = vpop.f32.mrb[0].mxu0
    %v253 = vadd.f32 0.0, %v252
    %v254 = vpop.f32.mrb[0].mxu0
    %255 = vdwg.mxu0
    %258 = vrot.lane.b32.xlu0 %v248, 96
    %v259 = vpop.permute.xlu0 %258
    %260 = vrot.lane.b32.xlu0 %v253, 96
    %v261 = vpop.permute.xlu0 %260
    %vm262 = vcmask 64512
    %v263 = vsel %vm262, %v248, 0
    %v265 = vsel %vm262, %v253, 0
    %v267 = vsel %vm262, %v259, 0
    %v269 = vsel %vm262, %v261, 0
    %271 = vmatprep.subr.mxu0 0.0
    %272 = vmatpush1.xpose.msra.mxu0 %v267
    %273 = vmatprep.subr.mxu0 0.0
    %274 = vmatpush1.xpose.msra.mxu0 %v269
    %275 = vmatprep.subr.mxu0 0.0
    %276 = vmatpush1.xpose.msra.mxu0 0.0
    %277 = vmatprep.subr.mxu0 0.0
    %278 = vmatpush1.xpose.msra.mxu0 0.0
    %279 = vmatprep.subr.mxu0 0.0
    %280 = vmatpush1.xpose.msra.mxu0 0.0
    %281 = vmatprep.subr.mxu0 0.0
    %282 = vmatpush1.xpose.msra.mxu0 0.0
    %283 = vmatprep.subr.mxu0 0.0
    %284 = vmatpush1.xpose.msra.mxu0 0.0
    %285 = vmatprep.subr.mxu0 0.0
    %286 = vmatpush1.xpose.msra.mxu0 0.0
    %287 = vmatprep.subr.mxu0 0.0
    %288 = vmatpush1.xpose.msra.mxu0 0.0
    %289 = vmatprep.subr.mxu0 0.0
    %290 = vmatpush1.xpose.msra.mxu0 0.0
    %291 = vmatprep.subr.mxu0 0.0
    %292 = vmatpush1.xpose.msra.mxu0 0.0
    %293 = vmatprep.subr.mxu0 0.0
    %294 = vmatpush1.xpose.msra.mxu0 0.0
    %295 = vmatprep.subr.mxu0 0.0
    %296 = vmatpush1.xpose.msra.mxu0 0.0
    %297 = vmatprep.subr.mxu0 0.0
    %298 = vmatpush1.xpose.msra.mxu0 0.0
    %299 = vmatprep.subr.mxu0 0.0
    %300 = vmatpush1.xpose.msra.mxu0 0.0
    %301 = vmatprep.subr.mxu0 0.0
    %302 = vmatpush1.xpose.msra.mxu0 0.0
    %303 = vmatprep.subr.mxu0 0.0
    %304 = vmatpush1.xpose.msra.mxu0 0.0
    %305 = vmatprep.subr.mxu0 0.0
    %306 = vmatpush1.xpose.msra.mxu0 0.0
    %307 = vmatprep.subr.mxu0 0.0
    %308 = vmatpush1.xpose.msra.mxu0 0.0
    %309 = vmatprep.subr.mxu0 0.0
    %310 = vmatpush1.xpose.msra.mxu0 0.0
    %311 = vmatprep.subr.mxu0 0.0
    %312 = vmatpush1.xpose.msra.mxu0 0.0
    %313 = vmatprep.subr.mxu0 0.0
    %314 = vmatpush1.xpose.msra.mxu0 0.0
    %315 = vmatprep.subr.mxu0 0.0
    %316 = vmatpush1.xpose.msra.mxu0 0.0
    %317 = vmatprep.subr.mxu0 0.0
    %318 = vmatpush1.xpose.msra.mxu0 0.0
    %319 = vmatprep.subr.mxu0 0.0
    %320 = vmatpush1.xpose.msra.mxu0 0.0
    %321 = vmatprep.subr.mxu0 0.0
    %322 = vmatpush1.xpose.msra.mxu0 0.0
    %323 = vmatprep.subr.mxu0 0.0
    %324 = vmatpush1.xpose.msra.mxu0 0.0
    %325 = vmatprep.subr.mxu0 0.0
    %326 = vmatpush1.xpose.msra.mxu0 0.0
    %327 = vmatprep.subr.mxu0 0.0
    %328 = vmatpush1.xpose.msra.mxu0 0.0
    %329 = vmatprep.subr.mxu0 0.0
    %330 = vmatpush1.xpose.msra.mxu0 0.0
    %331 = vmatprep.subr.mxu0 0.0
    %332 = vmatpush1.xpose.msra.mxu0 0.0
    %333 = vmatprep.subr.mxu0 0.0
    %334 = vmatpush1.xpose.msra.mxu0 0.0
    %335 = vmatprep.mubr.f32.mxu0 0.0
    %336 = vmatmul.mubr.f32.gmra.mrb[0].mxu0 %v263
    %v337 = vpop.f32.mrb[0].mxu0
    %v338 = vadd.f32 0.0, %v337
    %v339 = vpop.f32.mrb[0].mxu0
    %340 = vmatprep.mubr.f32.mxu0 0.0
    %341 = vmatmul.mubr.f32.gmra.mrb[0].mxu0 %v265
    %v342 = vpop.f32.mrb[0].mxu0
    %v343 = vadd.f32 0.0, %v342
    %v344 = vpop.f32.mrb[0].mxu0
    %345 = vdwg.mxu0
    %v346 = vmul.f32 %v338, 0.35355338
    %v347 = vmul.f32 %v343, 0.35355338
    %v348 = vadd.f32 %v346, %v117
    %v349 = vadd.f32 %v347, %v118
    %vm350 = vcmask 130048
    %v351 = vsel %vm350, %v348, -inf
    %352 = vmax.xlane.f32.xlu0 %v351
    %v353 = vpop.xlane.xlu0 %352
    %v354 = vsel %vm350, %v349, -inf
    %355 = vmax.xlane.f32.xlu0 %v354
    %v356 = vpop.xlane.xlu0 %355
    %v357 = vsub.f32 %v348, %v353
    %v358 = vsub.f32 %v349, %v356
    %v359 = vmul.f32 %v357, 1.442695
    %v360 = vpow.pop %v359
    %v361 = vmul.f32 %v358, 1.442695
    %v362 = vpow.pop %v361
    %v363 = vsel %vm350, %v360, 0.0
    %364 = vadd.xlane.f32.xlu0 %v363
    %v365 = vpop.xlane.xlu0 %364
    %v366 = vsel %vm350, %v362, 0.0
    %367 = vadd.xlane.f32.xlu0 %v366
    %v368 = vpop.xlane.xlu0 %367
    %v369 = vrcp.pop %v365
    %v370 = vrcp.pop %v368
    %v371 = vmul.f32 %v360, %v369
    %v372 = vmul.f32 %v362, %v370
    %373 = vrot.lane.b32.xlu0 %v248, 64
    %v374 = vpop.permute.xlu0 %373
    %375 = vrot.lane.b32.xlu0 %v253, 64
    %v376 = vpop.permute.xlu0 %375
    %v380 = vsel %vm350, %v371, 0
    %v383 = vsel %vm350, %v372, 0
    %385 = vmatprep.subr.mxu0 0.0
    %386 = vmatpush1.msra.mxu0 %v374
    %387 = vmatprep.subr.mxu0 0.0
    %388 = vmatpush1.msra.mxu0 %v376
    %389 = vmatprep.subr.mxu0 0.0
    %390 = vmatpush1.msra.mxu0 0.0
    %391 = vmatprep.subr.mxu0 0.0
    %392 = vmatpush1.msra.mxu0 0.0
    %393 = vmatprep.subr.mxu0 0.0
    %394 = vmatpush1.msra.mxu0 0.0
    %395 = vmatprep.subr.mxu0 0.0
    %396 = vmatpush1.msra.mxu0 0.0
    %397 = vmatprep.subr.mxu0 0.0
    %398 = vmatpush1.msra.mxu0 0.0
    %399 = vmatprep.subr.mxu0 0.0
    %400 = vmatpush1.msra.mxu0 0.0
    %401 = vmatprep.subr.mxu0 0.0
    %402 = vmatpush1.msra.mxu0 0.0
    %403 = vmatprep.subr.mxu0 0.0
    %404 = vmatpush1.msra.mxu0 0.0
    %405 = vmatprep.subr.mxu0 0.0
    %406 = vmatpush1.msra.mxu0 0.0
    %407 = vmatprep.subr.mxu0 0.0
    %408 = vmatpush1.msra.mxu0 0.0
    %409 = vmatprep.subr.mxu0 0.0
    %410 = vmatpush1.msra.mxu0 0.0
    %411 = vmatprep.subr.mxu0 0.0
    %412 = vmatpush1.msra.mxu0 0.0
    %413 = vmatprep.subr.mxu0 0.0
    %414 = vmatpush1.msra.mxu0 0.0
    %415 = vmatprep.subr.mxu0 0.0
    %416 = vmatpush1.msra.mxu0 0.0
    %417 = vmatprep.subr.mxu0 0.0
    %418 = vmatpush1.msra.mxu0 0.0
    %419 = vmatprep.subr.mxu0 0.0
    %420 = vmatpush1.msra.mxu0 0.0
    %421 = vmatprep.subr.mxu0 0.0
    %422 = vmatpush1.msra.mxu0 0.0
    %423 = vmatprep.subr.mxu0 0.0
    %424 = vmatpush1.msra.mxu0 0.0
    %425 = vmatprep.subr.mxu0 0.0
    %426 = vmatpush1.msra.mxu0 0.0
    %427 = vmatprep.subr.mxu0 0.0
    %428 = vmatpush1.msra.mxu0 0.0
    %429 = vmatprep.subr.mxu0 0.0
    %430 = vmatpush1.msra.mxu0 0.0
    %431 = vmatprep.subr.mxu0 0.0
    %432 = vmatpush1.msra.mxu0 0.0
    %433 = vmatprep.subr.mxu0 0.0
    %434 = vmatpush1.msra.mxu0 0.0
    %435 = vmatprep.subr.mxu0 0.0
    %436 = vmatpush1.msra.mxu0 0.0
    %437 = vmatprep.subr.mxu0 0.0
    %438 = vmatpush1.msra.mxu0 0.0
    %439 = vmatprep.subr.mxu0 0.0
    %440 = vmatpush1.msra.mxu0 0.0
    %441 = vmatprep.subr.mxu0 0.0
    %442 = vmatpush1.msra.mxu0 0.0
    %443 = vmatprep.subr.mxu0 0.0
    %444 = vmatpush1.msra.mxu0 0.0
    %445 = vmatprep.subr.mxu0 0.0
    %446 = vmatpush1.msra.mxu0 0.0
    %447 = vmatprep.subr.mxu0 0.0
    %448 = vmatpush1.msra.mxu0 0.0
    %449 = vmatprep.mubr.f32.mxu0 0.0
    %450 = vmatmul.mubr.f32.gmra.mrb[0].mxu0 %v380
    %v451 = vpop.f32.mrb[0].mxu0
    %v452 = vadd.f32 0.0, %v451
    %v453 = vpop.f32.mrb[0].mxu0
    %454 = vmatprep.mubr.f32.mxu0 0.0
    %455 = vmatmul.mubr.f32.gmra.mrb[0].mxu0 %v383
    %v456 = vpop.f32.mrb[0].mxu0
    %v457 = vadd.f32 0.0, %v456
    %v458 = vpop.f32.mrb[0].mxu0
    %459 = vdwg.mxu0
    %460 = vrot.lane.b32.xlu0 %v248, 120
    %v461 = vpop.permute.xlu0 %460
    %462 = vrot.lane.b32.xlu0 %v253, 120
    %v463 = vpop.permute.xlu0 %462
    %464 = vrot.lane.b32.xlu0 %v248, 88
    %v465 = vpop.permute.xlu0 %464
    %466 = vrot.lane.b32.xlu0 %v253, 88
    %v467 = vpop.permute.xlu0 %466
    %v468 = vsel %vm262, %v461, 0
    %v470 = vsel %vm262, %v463, 0
    %v472 = vsel %vm262, %v465, 0
    %v474 = vsel %vm262, %v467, 0
    %476 = vmatprep.subr.mxu0 0.0
    %477 = vmatpush1.xpose.msra.mxu0 %v472
    %478 = vmatprep.subr.mxu0 0.0
    %479 = vmatpush1.xpose.msra.mxu0 %v474
    %480 = vmatprep.subr.mxu0 0.0
    %481 = vmatpush1.xpose.msra.mxu0 0.0
    %482 = vmatprep.subr.mxu0 0.0
    %483 = vmatpush1.xpose.msra.mxu0 0.0
    %484 = vmatprep.subr.mxu0 0.0
    %485 = vmatpush1.xpose.msra.mxu0 0.0
    %486 = vmatprep.subr.mxu0 0.0
    %487 = vmatpush1.xpose.msra.mxu0 0.0
    %488 = vmatprep.subr.mxu0 0.0
    %489 = vmatpush1.xpose.msra.mxu0 0.0
    %490 = vmatprep.subr.mxu0 0.0
    %491 = vmatpush1.xpose.msra.mxu0 0.0
    %492 = vmatprep.subr.mxu0 0.0
    %493 = vmatpush1.xpose.msra.mxu0 0.0
    %494 = vmatprep.subr.mxu0 0.0
    %495 = vmatpush1.xpose.msra.mxu0 0.0
    %496 = vmatprep.subr.mxu0 0.0
    %497 = vmatpush1.xpose.msra.mxu0 0.0
    %498 = vmatprep.subr.mxu0 0.0
    %499 = vmatpush1.xpose.msra.mxu0 0.0
    %500 = vmatprep.subr.mxu0 0.0
    %501 = vmatpush1.xpose.msra.mxu0 0.0
    %502 = vmatprep.subr.mxu0 0.0
    %503 = vmatpush1.xpose.msra.mxu0 0.0
    %504 = vmatprep.subr.mxu0 0.0
    %505 = vmatpush1.xpose.msra.mxu0 0.0
    %506 = vmatprep.subr.mxu0 0.0
    %507 = vmatpush1.xpose.msra.mxu0 0.0
    %508 = vmatprep.subr.mxu0 0.0
    %509 = vmatpush1.xpose.msra.mxu0 0.0
    %510 = vmatprep.subr.mxu0 0.0
    %511 = vmatpush1.xpose.msra.mxu0 0.0
    %512 = vmatprep.subr.mxu0 0.0
    %513 = vmatpush1.xpose.msra.mxu0 0.0
    %514 = vmatprep.subr.mxu0 0.0
    %515 = vmatpush1.xpose.msra.mxu0 0.0
    %516 = vmatprep.subr.mxu0 0.0
    %517 = vmatpush1.xpose.msra.mxu0 0.0
    %518 = vmatprep.subr.mxu0 0.0
    %519 = vmatpush1.xpose.msra.mxu0 0.0
    %520 = vmatprep.subr.mxu0 0.0
    %521 = vmatpush1.xpose.msra.mxu0 0.0
    %522 = vmatprep.subr.mxu0 0.0
    %523 = vmatpush1.xpose.msra.mxu0 0.0
    %524 = vmatprep.subr.mxu0 0.0
    %525 = vmatpush1.xpose.msra.mxu0 0.0
    %526 = vmatprep.subr.mxu0 0.0
    %527 = vmatpush1.xpose.msra.mxu0 0.0
    %528 = vmatprep.subr.mxu0 0.0
    %529 = vmatpush1.xpose.msra.mxu0 0.0
    %530 = vmatprep.subr.mxu0 0.0
    %531 = vmatpush1.xpose.msra.mxu0 0.0
    %532 = vmatprep.subr.mxu0 0.0
    %533 = vmatpush1.xpose.msra.mxu0 0.0
    %534 = vmatprep.subr.mxu0 0.0
    %535 = vmatpush1.xpose.msra.mxu0 0.0
    %536 = vmatprep.subr.mxu0 0.0
    %537 = vmatpush1.xpose.msra.mxu0 0.0
    %538 = vmatprep.subr.mxu0 0.0
    %539 = vmatpush1.xpose.msra.mxu0 0.0
    %540 = vmatprep.mubr.f32.mxu0 0.0
    %541 = vmatmul.mubr.f32.gmra.mrb[0].mxu0 %v468
    %v542 = vpop.f32.mrb[0].mxu0
    %v543 = vadd.f32 0.0, %v542
    %v544 = vpop.f32.mrb[0].mxu0
    %545 = vmatprep.mubr.f32.mxu0 0.0
    %546 = vmatmul.mubr.f32.gmra.mrb[0].mxu0 %v470
    %v547 = vpop.f32.mrb[0].mxu0
    %v548 = vadd.f32 0.0, %v547
    %v549 = vpop.f32.mrb[0].mxu0
    %550 = vdwg.mxu0
    %v551 = vmul.f32 %v543, 0.35355338
    %v552 = vmul.f32 %v548, 0.35355338
    %v553 = vadd.f32 %v551, %v117
    %v554 = vadd.f32 %v552, %v118
    %v555 = vsel %vm350, %v553, -inf
    %556 = vmax.xlane.f32.xlu0 %v555
    %v557 = vpop.xlane.xlu0 %556
    %v558 = vsel %vm350, %v554, -inf
    %559 = vmax.xlane.f32.xlu0 %v558
    %v560 = vpop.xlane.xlu0 %559
    %v561 = vsub.f32 %v553, %v557
    %v562 = vsub.f32 %v554, %v560
    %v563 = vmul.f32 %v561, 1.442695
    %v564 = vpow.pop %v563
    %v565 = vmul.f32 %v562, 1.442695
    %v566 = vpow.pop %v565
    %v567 = vsel %vm350, %v564, 0.0
    %568 = vadd.xlane.f32.xlu0 %v567
    %v569 = vpop.xlane.xlu0 %568
    %v570 = vsel %vm350, %v566, 0.0
    %571 = vadd.xlane.f32.xlu0 %v570
    %v572 = vpop.xlane.xlu0 %571
    %v573 = vrcp.pop %v569
    %v574 = vrcp.pop %v572
    %v575 = vmul.f32 %v564, %v573
    %v576 = vmul.f32 %v566, %v574
    %577 = vrot.lane.b32.xlu0 %v248, 56
    %v578 = vpop.permute.xlu0 %577
    %579 = vrot.lane.b32.xlu0 %v253, 56
    %v580 = vpop.permute.xlu0 %579
    %v584 = vsel %vm350, %v575, 0
    %v587 = vsel %vm350, %v576, 0
    %589 = vmatprep.subr.mxu0 0.0
    %590 = vmatpush1.msra.mxu0 %v578
    %591 = vmatprep.subr.mxu0 0.0
    %592 = vmatpush1.msra.mxu0 %v580
    %593 = vmatprep.subr.mxu0 0.0
    %594 = vmatpush1.msra.mxu0 0.0
    %595 = vmatprep.subr.mxu0 0.0
    %596 = vmatpush1.msra.mxu0 0.0
    %597 = vmatprep.subr.mxu0 0.0
    %598 = vmatpush1.msra.mxu0 0.0
    %599 = vmatprep.subr.mxu0 0.0
    %600 = vmatpush1.msra.mxu0 0.0
    %601 = vmatprep.subr.mxu0 0.0
    %602 = vmatpush1.msra.mxu0 0.0
    %603 = vmatprep.subr.mxu0 0.0
    %604 = vmatpush1.msra.mxu0 0.0
    %605 = vmatprep.subr.mxu0 0.0
    %606 = vmatpush1.msra.mxu0 0.0
    %607 = vmatprep.subr.mxu0 0.0
    %608 = vmatpush1.msra.mxu0 0.0
    %609 = vmatprep.subr.mxu0 0.0
    %610 = vmatpush1.msra.mxu0 0.0
    %611 = vmatprep.subr.mxu0 0.0
    %612 = vmatpush1.msra.mxu0 0.0
    %613 = vmatprep.subr.mxu0 0.0
    %614 = vmatpush1.msra.mxu0 0.0
    %615 = vmatprep.subr.mxu0 0.0
    %616 = vmatpush1.msra.mxu0 0.0
    %617 = vmatprep.subr.mxu0 0.0
    %618 = vmatpush1.msra.mxu0 0.0
    %619 = vmatprep.subr.mxu0 0.0
    %620 = vmatpush1.msra.mxu0 0.0
    %621 = vmatprep.subr.mxu0 0.0
    %622 = vmatpush1.msra.mxu0 0.0
    %623 = vmatprep.subr.mxu0 0.0
    %624 = vmatpush1.msra.mxu0 0.0
    %625 = vmatprep.subr.mxu0 0.0
    %626 = vmatpush1.msra.mxu0 0.0
    %627 = vmatprep.subr.mxu0 0.0
    %628 = vmatpush1.msra.mxu0 0.0
    %629 = vmatprep.subr.mxu0 0.0
    %630 = vmatpush1.msra.mxu0 0.0
    %631 = vmatprep.subr.mxu0 0.0
    %632 = vmatpush1.msra.mxu0 0.0
    %633 = vmatprep.subr.mxu0 0.0
    %634 = vmatpush1.msra.mxu0 0.0
    %635 = vmatprep.subr.mxu0 0.0
    %636 = vmatpush1.msra.mxu0 0.0
    %637 = vmatprep.subr.mxu0 0.0
    %638 = vmatpush1.msra.mxu0 0.0
    %639 = vmatprep.subr.mxu0 0.0
    %640 = vmatpush1.msra.mxu0 0.0
    %641 = vmatprep.subr.mxu0 0.0
    %642 = vmatpush1.msra.mxu0 0.0
    %643 = vmatprep.subr.mxu0 0.0
    %644 = vmatpush1.msra.mxu0 0.0
    %645 = vmatprep.subr.mxu0 0.0
    %646 = vmatpush1.msra.mxu0 0.0
    %647 = vmatprep.subr.mxu0 0.0
    %648 = vmatpush1.msra.mxu0 0.0
    %649 = vmatprep.subr.mxu0 0.0
    %650 = vmatpush1.msra.mxu0 0.0
    %651 = vmatprep.subr.mxu0 0.0
    %652 = vmatpush1.msra.mxu0 0.0
    %653 = vmatprep.mubr.f32.mxu0 0.0
    %654 = vmatmul.mubr.f32.gmra.mrb[0].mxu0 %v584
    %v655 = vpop.f32.mrb[0].mxu0
    %v656 = vadd.f32 0.0, %v655
    %v657 = vpop.f32.mrb[0].mxu0
    %658 = vmatprep.mubr.f32.mxu0 0.0
    %659 = vmatmul.mubr.f32.gmra.mrb[0].mxu0 %v587
    %v660 = vpop.f32.mrb[0].mxu0
    %v661 = vadd.f32 0.0, %v660
    %v662 = vpop.f32.mrb[0].mxu0
    %663 = vdwg.mxu0
    %664 = vrot.lane.b32.xlu0 %v248, 112
    %v665 = vpop.permute.xlu0 %664
    %666 = vrot.lane.b32.xlu0 %v253, 112
    %v667 = vpop.permute.xlu0 %666
    %668 = vrot.lane.b32.xlu0 %v248, 80
    %v669 = vpop.permute.xlu0 %668
    %670 = vrot.lane.b32.xlu0 %v253, 80
    %v671 = vpop.permute.xlu0 %670
    %v672 = vsel %vm262, %v665, 0
    %v674 = vsel %vm262, %v667, 0
    %v676 = vsel %vm262, %v669, 0
    %v678 = vsel %vm262, %v671, 0
    %680 = vmatprep.subr.mxu0 0.0
    %681 = vmatpush1.xpose.msra.mxu0 %v676
    %682 = vmatprep.subr.mxu0 0.0
    %683 = vmatpush1.xpose.msra.mxu0 %v678
    %684 = vmatprep.subr.mxu0 0.0
    %685 = vmatpush1.xpose.msra.mxu0 0.0
    %686 = vmatprep.subr.mxu0 0.0
    %687 = vmatpush1.xpose.msra.mxu0 0.0
    %688 = vmatprep.subr.mxu0 0.0
    %689 = vmatpush1.xpose.msra.mxu0 0.0
    %690 = vmatprep.subr.mxu0 0.0
    %691 = vmatpush1.xpose.msra.mxu0 0.0
    %692 = vmatprep.subr.mxu0 0.0
    %693 = vmatpush1.xpose.msra.mxu0 0.0
    %694 = vmatprep.subr.mxu0 0.0
    %695 = vmatpush1.xpose.msra.mxu0 0.0
    %696 = vmatprep.subr.mxu0 0.0
    %697 = vmatpush1.xpose.msra.mxu0 0.0
    %698 = vmatprep.subr.mxu0 0.0
    %699 = vmatpush1.xpose.msra.mxu0 0.0
    %700 = vmatprep.subr.mxu0 0.0
    %701 = vmatpush1.xpose.msra.mxu0 0.0
    %702 = vmatprep.subr.mxu0 0.0
    %703 = vmatpush1.xpose.msra.mxu0 0.0
    %704 = vmatprep.subr.mxu0 0.0
    %705 = vmatpush1.xpose.msra.mxu0 0.0
    %706 = vmatprep.subr.mxu0 0.0
    %707 = vmatpush1.xpose.msra.mxu0 0.0
    %708 = vmatprep.subr.mxu0 0.0
    %709 = vmatpush1.xpose.msra.mxu0 0.0
    %710 = vmatprep.subr.mxu0 0.0
    %711 = vmatpush1.xpose.msra.mxu0 0.0
    %712 = vmatprep.subr.mxu0 0.0
    %713 = vmatpush1.xpose.msra.mxu0 0.0
    %714 = vmatprep.subr.mxu0 0.0
    %715 = vmatpush1.xpose.msra.mxu0 0.0
    %716 = vmatprep.subr.mxu0 0.0
    %717 = vmatpush1.xpose.msra.mxu0 0.0
    %718 = vmatprep.subr.mxu0 0.0
    %719 = vmatpush1.xpose.msra.mxu0 0.0
    %720 = vmatprep.subr.mxu0 0.0
    %721 = vmatpush1.xpose.msra.mxu0 0.0
    %722 = vmatprep.subr.mxu0 0.0
    %723 = vmatpush1.xpose.msra.mxu0 0.0
    %724 = vmatprep.subr.mxu0 0.0
    %725 = vmatpush1.xpose.msra.mxu0 0.0
    %726 = vmatprep.subr.mxu0 0.0
    %727 = vmatpush1.xpose.msra.mxu0 0.0
    %728 = vmatprep.subr.mxu0 0.0
    %729 = vmatpush1.xpose.msra.mxu0 0.0
    %730 = vmatprep.subr.mxu0 0.0
    %731 = vmatpush1.xpose.msra.mxu0 0.0
    %732 = vmatprep.subr.mxu0 0.0
    %733 = vmatpush1.xpose.msra.mxu0 0.0
    %734 = vmatprep.subr.mxu0 0.0
    %735 = vmatpush1.xpose.msra.mxu0 0.0
    %736 = vmatprep.subr.mxu0 0.0
    %737 = vmatpush1.xpose.msra.mxu0 0.0
    %738 = vmatprep.subr.mxu0 0.0
    %739 = vmatpush1.xpose.msra.mxu0 0.0
    %740 = vmatprep.subr.mxu0 0.0
    %741 = vmatpush1.xpose.msra.mxu0 0.0
    %742 = vmatprep.subr.mxu0 0.0
    %743 = vmatpush1.xpose.msra.mxu0 0.0
    %744 = vmatprep.mubr.f32.mxu0 0.0
    %745 = vmatmul.mubr.f32.gmra.mrb[0].mxu0 %v672
    %v746 = vpop.f32.mrb[0].mxu0
    %v747 = vadd.f32 0.0, %v746
    %v748 = vpop.f32.mrb[0].mxu0
    %749 = vmatprep.mubr.f32.mxu0 0.0
    %750 = vmatmul.mubr.f32.gmra.mrb[0].mxu0 %v674
    %v751 = vpop.f32.mrb[0].mxu0
    %v752 = vadd.f32 0.0, %v751
    %v753 = vpop.f32.mrb[0].mxu0
    %754 = vdwg.mxu0
    %v755 = vmul.f32 %v747, 0.35355338
    %v756 = vmul.f32 %v752, 0.35355338
    %v757 = vadd.f32 %v755, %v117
    %v758 = vadd.f32 %v756, %v118
    %v759 = vsel %vm350, %v757, -inf
    %760 = vmax.xlane.f32.xlu0 %v759
    %v761 = vpop.xlane.xlu0 %760
    %v762 = vsel %vm350, %v758, -inf
    %763 = vmax.xlane.f32.xlu0 %v762
    %v764 = vpop.xlane.xlu0 %763
    %v765 = vsub.f32 %v757, %v761
    %v766 = vsub.f32 %v758, %v764
    %v767 = vmul.f32 %v765, 1.442695
    %v768 = vpow.pop %v767
    %v769 = vmul.f32 %v766, 1.442695
    %v770 = vpow.pop %v769
    %v771 = vsel %vm350, %v768, 0.0
    %772 = vadd.xlane.f32.xlu0 %v771
    %v773 = vpop.xlane.xlu0 %772
    %v774 = vsel %vm350, %v770, 0.0
    %775 = vadd.xlane.f32.xlu0 %v774
    %v776 = vpop.xlane.xlu0 %775
    %v777 = vrcp.pop %v773
    %v778 = vrcp.pop %v776
    %v779 = vmul.f32 %v768, %v777
    %v780 = vmul.f32 %v770, %v778
    %781 = vrot.lane.b32.xlu0 %v248, 48
    %v782 = vpop.permute.xlu0 %781
    %783 = vrot.lane.b32.xlu0 %v253, 48
    %v784 = vpop.permute.xlu0 %783
    %v788 = vsel %vm350, %v779, 0
    %v791 = vsel %vm350, %v780, 0
    %793 = vmatprep.subr.mxu0 0.0
    %794 = vmatpush1.msra.mxu0 %v782
    %795 = vmatprep.subr.mxu0 0.0
    %796 = vmatpush1.msra.mxu0 %v784
    %797 = vmatprep.subr.mxu0 0.0
    %798 = vmatpush1.msra.mxu0 0.0
    %799 = vmatprep.subr.mxu0 0.0
    %800 = vmatpush1.msra.mxu0 0.0
    %801 = vmatprep.subr.mxu0 0.0
    %802 = vmatpush1.msra.mxu0 0.0
    %803 = vmatprep.subr.mxu0 0.0
    %804 = vmatpush1.msra.mxu0 0.0
    %805 = vmatprep.subr.mxu0 0.0
    %806 = vmatpush1.msra.mxu0 0.0
    %807 = vmatprep.subr.mxu0 0.0
    %808 = vmatpush1.msra.mxu0 0.0
    %809 = vmatprep.subr.mxu0 0.0
    %810 = vmatpush1.msra.mxu0 0.0
    %811 = vmatprep.subr.mxu0 0.0
    %812 = vmatpush1.msra.mxu0 0.0
    %813 = vmatprep.subr.mxu0 0.0
    %814 = vmatpush1.msra.mxu0 0.0
    %815 = vmatprep.subr.mxu0 0.0
    %816 = vmatpush1.msra.mxu0 0.0
    %817 = vmatprep.subr.mxu0 0.0
    %818 = vmatpush1.msra.mxu0 0.0
    %819 = vmatprep.subr.mxu0 0.0
    %820 = vmatpush1.msra.mxu0 0.0
    %821 = vmatprep.subr.mxu0 0.0
    %822 = vmatpush1.msra.mxu0 0.0
    %823 = vmatprep.subr.mxu0 0.0
    %824 = vmatpush1.msra.mxu0 0.0
    %825 = vmatprep.subr.mxu0 0.0
    %826 = vmatpush1.msra.mxu0 0.0
    %827 = vmatprep.subr.mxu0 0.0
    %828 = vmatpush1.msra.mxu0 0.0
    %829 = vmatprep.subr.mxu0 0.0
    %830 = vmatpush1.msra.mxu0 0.0
    %831 = vmatprep.subr.mxu0 0.0
    %832 = vmatpush1.msra.mxu0 0.0
    %833 = vmatprep.subr.mxu0 0.0
    %834 = vmatpush1.msra.mxu0 0.0
    %835 = vmatprep.subr.mxu0 0.0
    %836 = vmatpush1.msra.mxu0 0.0
    %837 = vmatprep.subr.mxu0 0.0
    %838 = vmatpush1.msra.mxu0 0.0
    %839 = vmatprep.subr.mxu0 0.0
    %840 = vmatpush1.msra.mxu0 0.0
    %841 = vmatprep.subr.mxu0 0.0
    %842 = vmatpush1.msra.mxu0 0.0
    %843 = vmatprep.subr.mxu0 0.0
    %844 = vmatpush1.msra.mxu0 0.0
    %845 = vmatprep.subr.mxu0 0.0
    %846 = vmatpush1.msra.mxu0 0.0
    %847 = vmatprep.subr.mxu0 0.0
    %848 = vmatpush1.msra.mxu0 0.0
    %849 = vmatprep.subr.mxu0 0.0
    %850 = vmatpush1.msra.mxu0 0.0
    %851 = vmatprep.subr.mxu0 0.0
    %852 = vmatpush1.msra.mxu0 0.0
    %853 = vmatprep.subr.mxu0 0.0
    %854 = vmatpush1.msra.mxu0 0.0
    %855 = vmatprep.subr.mxu0 0.0
    %856 = vmatpush1.msra.mxu0 0.0
    %857 = vmatprep.mubr.f32.mxu0 0.0
    %858 = vmatmul.mubr.f32.gmra.mrb[0].mxu0 %v788
    %v859 = vpop.f32.mrb[0].mxu0
    %v860 = vadd.f32 0.0, %v859
    %v861 = vpop.f32.mrb[0].mxu0
    %862 = vmatprep.mubr.f32.mxu0 0.0
    %863 = vmatmul.mubr.f32.gmra.mrb[0].mxu0 %v791
    %v864 = vpop.f32.mrb[0].mxu0
    %v865 = vadd.f32 0.0, %v864
    %v866 = vpop.f32.mrb[0].mxu0
    %867 = vdwg.mxu0
    %868 = vrot.lane.b32.xlu0 %v248, 104
    %v869 = vpop.permute.xlu0 %868
    %870 = vrot.lane.b32.xlu0 %v253, 104
    %v871 = vpop.permute.xlu0 %870
    %872 = vrot.lane.b32.xlu0 %v248, 72
    %v873 = vpop.permute.xlu0 %872
    %874 = vrot.lane.b32.xlu0 %v253, 72
    %v875 = vpop.permute.xlu0 %874
    %v876 = vsel %vm262, %v869, 0
    %v878 = vsel %vm262, %v871, 0
    %v880 = vsel %vm262, %v873, 0
    %v882 = vsel %vm262, %v875, 0
    %884 = vmatprep.subr.mxu0 0.0
    %885 = vmatpush1.xpose.msra.mxu0 %v880
    %886 = vmatprep.subr.mxu0 0.0
    %887 = vmatpush1.xpose.msra.mxu0 %v882
    %888 = vmatprep.subr.mxu0 0.0
    %889 = vmatpush1.xpose.msra.mxu0 0.0
    %890 = vmatprep.subr.mxu0 0.0
    %891 = vmatpush1.xpose.msra.mxu0 0.0
    %892 = vmatprep.subr.mxu0 0.0
    %893 = vmatpush1.xpose.msra.mxu0 0.0
    %894 = vmatprep.subr.mxu0 0.0
    %895 = vmatpush1.xpose.msra.mxu0 0.0
    %896 = vmatprep.subr.mxu0 0.0
    %897 = vmatpush1.xpose.msra.mxu0 0.0
    %898 = vmatprep.subr.mxu0 0.0
    %899 = vmatpush1.xpose.msra.mxu0 0.0
    %900 = vmatprep.subr.mxu0 0.0
    %901 = vmatpush1.xpose.msra.mxu0 0.0
    %902 = vmatprep.subr.mxu0 0.0
    %903 = vmatpush1.xpose.msra.mxu0 0.0
    %904 = vmatprep.subr.mxu0 0.0
    %905 = vmatpush1.xpose.msra.mxu0 0.0
    %906 = vmatprep.subr.mxu0 0.0
    %907 = vmatpush1.xpose.msra.mxu0 0.0
    %908 = vmatprep.subr.mxu0 0.0
    %909 = vmatpush1.xpose.msra.mxu0 0.0
    %910 = vmatprep.subr.mxu0 0.0
    %911 = vmatpush1.xpose.msra.mxu0 0.0
    %912 = vmatprep.subr.mxu0 0.0
    %913 = vmatpush1.xpose.msra.mxu0 0.0
    %914 = vmatprep.subr.mxu0 0.0
    %915 = vmatpush1.xpose.msra.mxu0 0.0
    %916 = vmatprep.subr.mxu0 0.0
    %917 = vmatpush1.xpose.msra.mxu0 0.0
    %918 = vmatprep.subr.mxu0 0.0
    %919 = vmatpush1.xpose.msra.mxu0 0.0
    %920 = vmatprep.subr.mxu0 0.0
    %921 = vmatpush1.xpose.msra.mxu0 0.0
    %922 = vmatprep.subr.mxu0 0.0
    %923 = vmatpush1.xpose.msra.mxu0 0.0
    %924 = vmatprep.subr.mxu0 0.0
    %925 = vmatpush1.xpose.msra.mxu0 0.0
    %926 = vmatprep.subr.mxu0 0.0
    %927 = vmatpush1.xpose.msra.mxu0 0.0
    %928 = vmatprep.subr.mxu0 0.0
    %929 = vmatpush1.xpose.msra.mxu0 0.0
    %930 = vmatprep.subr.mxu0 0.0
    %931 = vmatpush1.xpose.msra.mxu0 0.0
    %932 = vmatprep.subr.mxu0 0.0
    %933 = vmatpush1.xpose.msra.mxu0 0.0
    %934 = vmatprep.subr.mxu0 0.0
    %935 = vmatpush1.xpose.msra.mxu0 0.0
    %936 = vmatprep.subr.mxu0 0.0
    %937 = vmatpush1.xpose.msra.mxu0 0.0
    %938 = vmatprep.subr.mxu0 0.0
    %939 = vmatpush1.xpose.msra.mxu0 0.0
    %940 = vmatprep.subr.mxu0 0.0
    %941 = vmatpush1.xpose.msra.mxu0 0.0
    %942 = vmatprep.subr.mxu0 0.0
    %943 = vmatpush1.xpose.msra.mxu0 0.0
    %944 = vmatprep.subr.mxu0 0.0
    %945 = vmatpush1.xpose.msra.mxu0 0.0
    %946 = vmatprep.subr.mxu0 0.0
    %947 = vmatpush1.xpose.msra.mxu0 0.0
    %948 = vmatprep.mubr.f32.mxu0 0.0
    %949 = vmatmul.mubr.f32.gmra.mrb[0].mxu0 %v876
    %v950 = vpop.f32.mrb[0].mxu0
    %v951 = vadd.f32 0.0, %v950
    %v952 = vpop.f32.mrb[0].mxu0
    %953 = vmatprep.mubr.f32.mxu0 0.0
    %954 = vmatmul.mubr.f32.gmra.mrb[0].mxu0 %v878
    %v955 = vpop.f32.mrb[0].mxu0
    %v956 = vadd.f32 0.0, %v955
    %v957 = vpop.f32.mrb[0].mxu0
    %958 = vdwg.mxu0
    %v959 = vmul.f32 %v951, 0.35355338
    %v960 = vmul.f32 %v956, 0.35355338
    %v961 = vadd.f32 %v959, %v117
    %v962 = vadd.f32 %v960, %v118
    %v963 = vsel %vm350, %v961, -inf
    %964 = vmax.xlane.f32.xlu0 %v963
    %v965 = vpop.xlane.xlu0 %964
    %v966 = vsel %vm350, %v962, -inf
    %967 = vmax.xlane.f32.xlu0 %v966
    %v968 = vpop.xlane.xlu0 %967
    %v969 = vsub.f32 %v961, %v965
    %v970 = vsub.f32 %v962, %v968
    %v971 = vmul.f32 %v969, 1.442695
    %v972 = vpow.pop %v971
    %v973 = vmul.f32 %v970, 1.442695
    %v974 = vpow.pop %v973
    %v975 = vsel %vm350, %v972, 0.0
    %976 = vadd.xlane.f32.xlu0 %v975
    %v977 = vpop.xlane.xlu0 %976
    %v978 = vsel %vm350, %v974, 0.0
    %979 = vadd.xlane.f32.xlu0 %v978
    %v980 = vpop.xlane.xlu0 %979
    %v981 = vrcp.pop %v977
    %v982 = vrcp.pop %v980
    %v983 = vmul.f32 %v972, %v981
    %v984 = vmul.f32 %v974, %v982
    %985 = vrot.lane.b32.xlu0 %v248, 40
    %v986 = vpop.permute.xlu0 %985
    %987 = vrot.lane.b32.xlu0 %v253, 40
    %v988 = vpop.permute.xlu0 %987
    %v992 = vsel %vm350, %v983, 0
    %v995 = vsel %vm350, %v984, 0
    %997 = vmatprep.subr.mxu0 0.0
    %998 = vmatpush1.msra.mxu0 %v986
    %999 = vmatprep.subr.mxu0 0.0
    %1000 = vmatpush1.msra.mxu0 %v988
    %1001 = vmatprep.subr.mxu0 0.0
    %1002 = vmatpush1.msra.mxu0 0.0
    %1003 = vmatprep.subr.mxu0 0.0
    %1004 = vmatpush1.msra.mxu0 0.0
    %1005 = vmatprep.subr.mxu0 0.0
    %1006 = vmatpush1.msra.mxu0 0.0
    %1007 = vmatprep.subr.mxu0 0.0
    %1008 = vmatpush1.msra.mxu0 0.0
    %1009 = vmatprep.subr.mxu0 0.0
    %1010 = vmatpush1.msra.mxu0 0.0
    %1011 = vmatprep.subr.mxu0 0.0
    %1012 = vmatpush1.msra.mxu0 0.0
    %1013 = vmatprep.subr.mxu0 0.0
    %1014 = vmatpush1.msra.mxu0 0.0
    %1015 = vmatprep.subr.mxu0 0.0
    %1016 = vmatpush1.msra.mxu0 0.0
    %1017 = vmatprep.subr.mxu0 0.0
    %1018 = vmatpush1.msra.mxu0 0.0
    %1019 = vmatprep.subr.mxu0 0.0
    %1020 = vmatpush1.msra.mxu0 0.0
    %1021 = vmatprep.subr.mxu0 0.0
    %1022 = vmatpush1.msra.mxu0 0.0
    %1023 = vmatprep.subr.mxu0 0.0
    %1024 = vmatpush1.msra.mxu0 0.0
    %1025 = vmatprep.subr.mxu0 0.0
    %1026 = vmatpush1.msra.mxu0 0.0
    %1027 = vmatprep.subr.mxu0 0.0
    %1028 = vmatpush1.msra.mxu0 0.0
    %1029 = vmatprep.subr.mxu0 0.0
    %1030 = vmatpush1.msra.mxu0 0.0
    %1031 = vmatprep.subr.mxu0 0.0
    %1032 = vmatpush1.msra.mxu0 0.0
    %1033 = vmatprep.subr.mxu0 0.0
    %1034 = vmatpush1.msra.mxu0 0.0
    %1035 = vmatprep.subr.mxu0 0.0
    %1036 = vmatpush1.msra.mxu0 0.0
    %1037 = vmatprep.subr.mxu0 0.0
    %1038 = vmatpush1.msra.mxu0 0.0
    %1039 = vmatprep.subr.mxu0 0.0
    %1040 = vmatpush1.msra.mxu0 0.0
    %1041 = vmatprep.subr.mxu0 0.0
    %1042 = vmatpush1.msra.mxu0 0.0
    %1043 = vmatprep.subr.mxu0 0.0
    %1044 = vmatpush1.msra.mxu0 0.0
    %1045 = vmatprep.subr.mxu0 0.0
    %1046 = vmatpush1.msra.mxu0 0.0
    %1047 = vmatprep.subr.mxu0 0.0
    %1048 = vmatpush1.msra.mxu0 0.0
    %1049 = vmatprep.subr.mxu0 0.0
    %1050 = vmatpush1.msra.mxu0 0.0
    %1051 = vmatprep.subr.mxu0 0.0
    %1052 = vmatpush1.msra.mxu0 0.0
    %1053 = vmatprep.subr.mxu0 0.0
    %1054 = vmatpush1.msra.mxu0 0.0
    %1055 = vmatprep.subr.mxu0 0.0
    %1056 = vmatpush1.msra.mxu0 0.0
    %1057 = vmatprep.subr.mxu0 0.0
    %1058 = vmatpush1.msra.mxu0 0.0
    %1059 = vmatprep.subr.mxu0 0.0
    %1060 = vmatpush1.msra.mxu0 0.0
    %1061 = vmatprep.mubr.f32.mxu0 0.0
    %1062 = vmatmul.mubr.f32.gmra.mrb[0].mxu0 %v992
    %v1063 = vpop.f32.mrb[0].mxu0
    %v1064 = vadd.f32 0.0, %v1063
    %v1065 = vpop.f32.mrb[0].mxu0
    %1066 = vmatprep.mubr.f32.mxu0 0.0
    %1067 = vmatmul.mubr.f32.gmra.mrb[0].mxu0 %v995
    %v1068 = vpop.f32.mrb[0].mxu0
    %v1069 = vadd.f32 0.0, %v1068
    %v1070 = vpop.f32.mrb[0].mxu0
    %1071 = vdwg.mxu0
    %1074 = vrot.lane.b32.xlu0 %v656, 8
    %v1075 = vpop.permute.xlu0 %1074
    %1076 = vrot.lane.b32.xlu0 %v661, 8
    %v1077 = vpop.permute.xlu0 %1076
    %1082 = vrot.lane.b32.xlu0 %v860, 16
    %v1083 = vpop.permute.xlu0 %1082
    %1084 = vrot.lane.b32.xlu0 %v865, 16
    %v1085 = vpop.permute.xlu0 %1084
    %1090 = vrot.lane.b32.xlu0 %v1064, 24
    %v1091 = vpop.permute.xlu0 %1090
    %1092 = vrot.lane.b32.xlu0 %v1069, 24
    %v1093 = vpop.permute.xlu0 %1092
    %v1096 = vsel %vm262, %v452, %v1075
    %v1097 = vsel %vm262, %v457, %v1077
    %v1098 = vsel %vm350, %v1096, %v1083
    %v1099 = vsel %vm350, %v1097, %v1085
    %vm1100 = vcmask 195584
    %v1101 = vsel %vm1100, %v1098, %v1091
    %v1102 = vsel %vm1100, %v1099, %v1093
    %v1103 = vld [vmem:[%s6] sm:$0xff]
    %v1104 = vld [vmem:[%s6 + $0x8] sm:$0xff]
    %v1105 = vld [vmem:[%s6 + $0x10] sm:$0xff]
    %v1106 = vld [vmem:[%s6 + $0x18] sm:$0xff]
    %v1108 = vsel %vm123, %v1101, 0
    %v1111 = vsel %vm123, %v1102, 0
    %1113 = vmatprep.subr.mxu0 0.0
    %1114 = vmatpush1.msra.mxu0 %v1103
    %1115 = vmatprep.subr.mxu0 0.0
    %1116 = vmatpush1.msra.mxu0 %v1104
    %1117 = vmatprep.subr.mxu0 0.0
    %1118 = vmatpush1.msra.mxu0 %v1105
    %1119 = vmatprep.subr.mxu0 0.0
    %1120 = vmatpush1.msra.mxu0 %v1106
    %1121 = vmatprep.subr.mxu0 0.0
    %1122 = vmatpush1.msra.mxu0 0.0
    %1123 = vmatprep.subr.mxu0 0.0
    %1124 = vmatpush1.msra.mxu0 0.0
    %1125 = vmatprep.subr.mxu0 0.0
    %1126 = vmatpush1.msra.mxu0 0.0
    %1127 = vmatprep.subr.mxu0 0.0
    %1128 = vmatpush1.msra.mxu0 0.0
    %1129 = vmatprep.subr.mxu0 0.0
    %1130 = vmatpush1.msra.mxu0 0.0
    %1131 = vmatprep.subr.mxu0 0.0
    %1132 = vmatpush1.msra.mxu0 0.0
    %1133 = vmatprep.subr.mxu0 0.0
    %1134 = vmatpush1.msra.mxu0 0.0
    %1135 = vmatprep.subr.mxu0 0.0
    %1136 = vmatpush1.msra.mxu0 0.0
    %1137 = vmatprep.subr.mxu0 0.0
    %1138 = vmatpush1.msra.mxu0 0.0
    %1139 = vmatprep.subr.mxu0 0.0
    %1140 = vmatpush1.msra.mxu0 0.0
    %1141 = vmatprep.subr.mxu0 0.0
    %1142 = vmatpush1.msra.mxu0 0.0
    %1143 = vmatprep.subr.mxu0 0.0
    %1144 = vmatpush1.msra.mxu0 0.0
    %1145 = vmatprep.subr.mxu0 0.0
    %1146 = vmatpush1.msra.mxu0 0.0
    %1147 = vmatprep.subr.mxu0 0.0
    %1148 = vmatpush1.msra.mxu0 0.0
    %1149 = vmatprep.subr.mxu0 0.0
    %1150 = vmatpush1.msra.mxu0 0.0
    %1151 = vmatprep.subr.mxu0 0.0
    %1152 = vmatpush1.msra.mxu0 0.0
    %1153 = vmatprep.subr.mxu0 0.0
    %1154 = vmatpush1.msra.mxu0 0.0
    %1155 = vmatprep.subr.mxu0 0.0
    %1156 = vmatpush1.msra.mxu0 0.0
    %1157 = vmatprep.subr.mxu0 0.0
    %1158 = vmatpush1.msra.mxu0 0.0
    %1159 = vmatprep.subr.mxu0 0.0
    %1160 = vmatpush1.msra.mxu0 0.0
    %1161 = vmatprep.subr.mxu0 0.0
    %1162 = vmatpush1.msra.mxu0 0.0
    %1163 = vmatprep.subr.mxu0 0.0
    %1164 = vmatpush1.msra.mxu0 0.0
    %1165 = vmatprep.subr.mxu0 0.0
    %1166 = vmatpush1.msra.mxu0 0.0
    %1167 = vmatprep.subr.mxu0 0.0
    %1168 = vmatpush1.msra.mxu0 0.0
    %1169 = vmatprep.subr.mxu0 0.0
    %1170 = vmatpush1.msra.mxu0 0.0
    %1171 = vmatprep.subr.mxu0 0.0
    %1172 = vmatpush1.msra.mxu0 0.0
    %1173 = vmatprep.subr.mxu0 0.0
    %1174 = vmatpush1.msra.mxu0 0.0
    %1175 = vmatprep.subr.mxu0 0.0
    %1176 = vmatpush1.msra.mxu0 0.0
    %1177 = vmatprep.mubr.f32.mxu0 0.0
    %1178 = vmatmul.mubr.f32.gmra.mrb[0].mxu0 %v1108
    %v1179 = vpop.f32.mrb[0].mxu0
    %v1180 = vadd.f32 0.0, %v1179
    %v1181 = vpop.f32.mrb[0].mxu0
    %1182 = vmatprep.mubr.f32.mxu0 0.0
    %1183 = vmatmul.mubr.f32.gmra.mrb[0].mxu0 %v1111
    %v1184 = vpop.f32.mrb[0].mxu0
    %v1185 = vadd.f32 0.0, %v1184
    %v1186 = vpop.f32.mrb[0].mxu0
    %1187 = vdwg.mxu0
    %v1188 = vadd.f32 %v98, %v1180
    %v1189 = vadd.f32 %v99, %v1185
    %v1190 = vld [vmem:[%s7] sm:$0x1]
    %v1191 = vld [vmem:[%s8] sm:$0x1]
    %v1192 = vsel %vm123, %v1188, 0.0
    %1193 = vadd.xlane.f32.xlu0 %v1192
    %v1194 = vpop.xlane.xlu0 %1193
    %v1195 = vsel %vm123, %v1189, 0.0
    %1196 = vadd.xlane.f32.xlu0 %v1195
    %v1197 = vpop.xlane.xlu0 %1196
    %v1198 = vmul.f32 %v1194, %v130
    %v1199 = vmul.f32 %v1197, %v130
    %v1200 = vmul.f32 %v1188, %v1188
    %v1201 = vmul.f32 %v1189, %v1189
    %v1202 = vsel %vm123, %v1200, 0.0
    %1203 = vadd.xlane.f32.xlu0 %v1202
    %v1204 = vpop.xlane.xlu0 %1203
    %v1205 = vsel %vm123, %v1201, 0.0
    %1206 = vadd.xlane.f32.xlu0 %v1205
    %v1207 = vpop.xlane.xlu0 %1206
    %v1208 = vmul.f32 %v1204, %v130
    %v1209 = vmul.f32 %v1207, %v130
    %v1210 = vmul.f32 %v1198, %v1198
    %v1211 = vmul.f32 %v1199, %v1199
    %v1212 = vsub.f32 %v1208, %v1210
    %v1213 = vsub.f32 %v1209, %v1211
    %v1214 = vsub.f32 %v1188, %v1198
    %v1215 = vsub.f32 %v1189, %v1199
    %v1216 = vadd.f32 %v1212, 1e-05
    %v1217 = vadd.f32 %v1213, 1e-05
    %v1218 = vrsqrt.pop %v1216
    %v1219 = vrsqrt.pop %v1217
    %v1220 = vmul.f32 %v1214, %v1218
    %v1221 = vmul.f32 %v1215, %v1219
    %v1223 = vlaneseq
    %v1224 = vshrl.u32 %v1223, 7
    %v1225 = vsub.s32 0, %v1224
    %v1226 = vrot.slane %v1190, %v1225
    %v1228 = vmul.f32 %v1220, %v1226
    %v1229 = vmul.f32 %v1221, %v1226
    %v1231 = vlaneseq
    %v1232 = vshrl.u32 %v1231, 7
    %v1233 = vsub.s32 0, %v1232
    %v1234 = vrot.slane %v1191, %v1233
    %v1236 = vadd.f32 %v1228, %v1234
    %v1237 = vadd.f32 %v1229, %v1234
    %v1238 = vld [vmem:[%s9] sm:$0xff]
    %v1239 = vld [vmem:[%s9 + $0x8] sm:$0xff]
    %v1240 = vld [vmem:[%s9 + $0x10] sm:$0xff]
    %v1241 = vld [vmem:[%s9 + $0x18] sm:$0xff]
    %v1243 = vsel %vm123, %v1236, 0
    %v1246 = vsel %vm123, %v1237, 0
    %1248 = vmatprep.subr.mxu0 0.0
    %1249 = vmatpush1.msra.mxu0 %v1238
    %1250 = vmatprep.subr.mxu0 0.0
    %1251 = vmatpush1.msra.mxu0 %v1239
    %1252 = vmatprep.subr.mxu0 0.0
    %1253 = vmatpush1.msra.mxu0 %v1240
    %1254 = vmatprep.subr.mxu0 0.0
    %1255 = vmatpush1.msra.mxu0 %v1241
    %1256 = vmatprep.subr.mxu0 0.0
    %1257 = vmatpush1.msra.mxu0 0.0
    %1258 = vmatprep.subr.mxu0 0.0
    %1259 = vmatpush1.msra.mxu0 0.0
    %1260 = vmatprep.subr.mxu0 0.0
    %1261 = vmatpush1.msra.mxu0 0.0
    %1262 = vmatprep.subr.mxu0 0.0
    %1263 = vmatpush1.msra.mxu0 0.0
    %1264 = vmatprep.subr.mxu0 0.0
    %1265 = vmatpush1.msra.mxu0 0.0
    %1266 = vmatprep.subr.mxu0 0.0
    %1267 = vmatpush1.msra.mxu0 0.0
    %1268 = vmatprep.subr.mxu0 0.0
    %1269 = vmatpush1.msra.mxu0 0.0
    %1270 = vmatprep.subr.mxu0 0.0
    %1271 = vmatpush1.msra.mxu0 0.0
    %1272 = vmatprep.subr.mxu0 0.0
    %1273 = vmatpush1.msra.mxu0 0.0
    %1274 = vmatprep.subr.mxu0 0.0
    %1275 = vmatpush1.msra.mxu0 0.0
    %1276 = vmatprep.subr.mxu0 0.0
    %1277 = vmatpush1.msra.mxu0 0.0
    %1278 = vmatprep.subr.mxu0 0.0
    %1279 = vmatpush1.msra.mxu0 0.0
    %1280 = vmatprep.subr.mxu0 0.0
    %1281 = vmatpush1.msra.mxu0 0.0
    %1282 = vmatprep.subr.mxu0 0.0
    %1283 = vmatpush1.msra.mxu0 0.0
    %1284 = vmatprep.subr.mxu0 0.0
    %1285 = vmatpush1.msra.mxu0 0.0
    %1286 = vmatprep.subr.mxu0 0.0
    %1287 = vmatpush1.msra.mxu0 0.0
    %1288 = vmatprep.subr.mxu0 0.0
    %1289 = vmatpush1.msra.mxu0 0.0
    %1290 = vmatprep.subr.mxu0 0.0
    %1291 = vmatpush1.msra.mxu0 0.0
    %1292 = vmatprep.subr.mxu0 0.0
    %1293 = vmatpush1.msra.mxu0 0.0
    %1294 = vmatprep.subr.mxu0 0.0
    %1295 = vmatpush1.msra.mxu0 0.0
    %1296 = vmatprep.subr.mxu0 0.0
    %1297 = vmatpush1.msra.mxu0 0.0
    %1298 = vmatprep.subr.mxu0 0.0
    %1299 = vmatpush1.msra.mxu0 0.0
    %1300 = vmatprep.subr.mxu0 0.0
    %1301 = vmatpush1.msra.mxu0 0.0
    %1302 = vmatprep.subr.mxu0 0.0
    %1303 = vmatpush1.msra.mxu0 0.0
    %1304 = vmatprep.subr.mxu0 0.0
    %1305 = vmatpush1.msra.mxu0 0.0
    %1306 = vmatprep.subr.mxu0 0.0
    %1307 = vmatpush1.msra.mxu0 0.0
    %1308 = vmatprep.subr.mxu0 0.0
    %1309 = vmatpush1.msra.mxu0 0.0
    %1310 = vmatprep.subr.mxu0 0.0
    %1311 = vmatpush1.msra.mxu0 0.0
    %1312 = vmatprep.mubr.f32.mxu0 0.0
    %1313 = vmatmul.mubr.f32.gmra.mrb[0].mxu0 %v1243
    %v1314 = vpop.f32.mrb[0].mxu0
    %v1315 = vadd.f32 0.0, %v1314
    %v1316 = vpop.f32.mrb[0].mxu0
    %1317 = vmatprep.mubr.f32.mxu0 0.0
    %1318 = vmatmul.mubr.f32.gmra.mrb[0].mxu0 %v1246
    %v1319 = vpop.f32.mrb[0].mxu0
    %v1320 = vadd.f32 0.0, %v1319
    %v1321 = vpop.f32.mrb[0].mxu0
    %1322 = vdwg.mxu0
    %v1323 = vld [vmem:[#allocation5] sm:$0xff]
    %v1324 = vld [vmem:[#allocation5 + $0x8] sm:$0xff]
    %v1325 = vld [vmem:[#allocation7] sm:$0xff]
    %v1326 = vld [vmem:[#allocation7 + $0x8] sm:$0xff]
    %v1328 = vsel %vm262, %v1323, 0
    %v1331 = vsel %vm262, %v1324, 0
    %v1334 = vsel %vm262, %v1325, 0
    %v1337 = vsel %vm262, %v1326, 0
    %1339 = vmatprep.subr.mxu0 0.0
    %1340 = vmatpush1.xpose.msra.mxu0 %v1334
    %1341 = vmatprep.subr.mxu0 0.0
    %1342 = vmatpush1.xpose.msra.mxu0 %v1337
    %1343 = vmatprep.subr.mxu0 0.0
    %1344 = vmatpush1.xpose.msra.mxu0 0.0
    %1345 = vmatprep.subr.mxu0 0.0
    %1346 = vmatpush1.xpose.msra.mxu0 0.0
    %1347 = vmatprep.subr.mxu0 0.0
    %1348 = vmatpush1.xpose.msra.mxu0 0.0
    %1349 = vmatprep.subr.mxu0 0.0
    %1350 = vmatpush1.xpose.msra.mxu0 0.0
    %1351 = vmatprep.subr.mxu0 0.0
    %1352 = vmatpush1.xpose.msra.mxu0 0.0
    %1353 = vmatprep.subr.mxu0 0.0
    %1354 = vmatpush1.xpose.msra.mxu0 0.0
    %1355 = vmatprep.subr.mxu0 0.0
    %1356 = vmatpush1.xpose.msra.mxu0 0.0
    %1357 = vmatprep.subr.mxu0 0.0
    %1358 = vmatpush1.xpose.msra.mxu0 0.0
    %1359 = vmatprep.subr.mxu0 0.0
    %1360 = vmatpush1.xpose.msra.mxu0 0.0
    %1361 = vmatprep.subr.mxu0 0.0
    %1362 = vmatpush1.xpose.msra.mxu0 0.0
    %1363 = vmatprep.subr.mxu0 0.0
    %1364 = vmatpush1.xpose.msra.mxu0 0.0
    %1365 = vmatprep.subr.mxu0 0.0
    %1366 = vmatpush1.xpose.msra.mxu0 0.0
    %1367 = vmatprep.subr.mxu0 0.0
    %1368 = vmatpush1.xpose.msra.mxu0 0.0
    %1369 = vmatprep.subr.mxu0 0.0
    %1370 = vmatpush1.xpose.msra.mxu0 0.0
    %1371 = vmatprep.subr.mxu0 0.0
    %1372 = vmatpush1.xpose.msra.mxu0 0.0
    %1373 = vmatprep.subr.mxu0 0.0
    %1374 = vmatpush1.xpose.msra.mxu0 0.0
    %1375 = vmatprep.subr.mxu0 0.0
    %1376 = vmatpush1.xpose.msra.mxu0 0.0
    %1377 = vmatprep.subr.mxu0 0.0
    %1378 = vmatpush1.xpose.msra.mxu0 0.0
    %1379 = vmatprep.subr.mxu0 0.0
    %1380 = vmatpush1.xpose.msra.mxu0 0.0
    %1381 = vmatprep.subr.mxu0 0.0
    %1382 = vmatpush1.xpose.msra.mxu0 0.0
    %1383 = vmatprep.subr.mxu0 0.0
    %1384 = vmatpush1.xpose.msra.mxu0 0.0
    %1385 = vmatprep.subr.mxu0 0.0
    %1386 = vmatpush1.xpose.msra.mxu0 0.0
    %1387 = vmatprep.subr.mxu0 0.0
    %1388 = vmatpush1.xpose.msra.mxu0 0.0
    %1389 = vmatprep.subr.mxu0 0.0
    %1390 = vmatpush1.xpose.msra.mxu0 0.0
    %1391 = vmatprep.subr.mxu0 0.0
    %1392 = vmatpush1.xpose.msra.mxu0 0.0
    %1393 = vmatprep.subr.mxu0 0.0
    %1394 = vmatpush1.xpose.msra.mxu0 0.0
    %1395 = vmatprep.subr.mxu0 0.0
    %1396 = vmatpush1.xpose.msra.mxu0 0.0
    %1397 = vmatprep.subr.mxu0 0.0
    %1398 = vmatpush1.xpose.msra.mxu0 0.0
    %1399 = vmatprep.subr.mxu0 0.0
    %1400 = vmatpush1.xpose.msra.mxu0 0.0
    %1401 = vmatprep.subr.mxu0 0.0
    %1402 = vmatpush1.xpose.msra.mxu0 0.0
    %1403 = vmatprep.mubr.f32.mxu0 0.0
    %1404 = vmatmul.mubr.f32.gmra.mrb[0].mxu0 %v1328
    %v1405 = vpop.f32.mrb[0].mxu0
    %v1406 = vadd.f32 0.0, %v1405
    %v1407 = vpop.f32.mrb[0].mxu0
    %1408 = vmatprep.mubr.f32.mxu0 0.0
    %1409 = vmatmul.mubr.f32.gmra.mrb[0].mxu0 %v1331
    %v1410 = vpop.f32.mrb[0].mxu0
    %v1411 = vadd.f32 0.0, %v1410
    %v1412 = vpop.f32.mrb[0].mxu0
    %1413 = vdwg.mxu0
    %v1414 = vmul.f32 %v1406, 0.35355338
    %v1415 = vmul.f32 %v1411, 0.35355338
    %v1416 = vadd.f32 %v1414, %v119
    %v1417 = vadd.f32 %v1415, %v120
    %v1418 = vsel %vm350, %v1416, -inf
    %1419 = vmax.xlane.f32.xlu0 %v1418
    %v1420 = vpop.xlane.xlu0 %1419
    %v1421 = vsel %vm350, %v1417, -inf
    %1422 = vmax.xlane.f32.xlu0 %v1421
    %v1423 = vpop.xlane.xlu0 %1422
    %v1424 = vsub.f32 %v1416, %v1420
    %v1425 = vsub.f32 %v1417, %v1423
    %v1426 = vmul.f32 %v1424, 1.442695
    %v1427 = vpow.pop %v1426
    %v1428 = vmul.f32 %v1425, 1.442695
    %v1429 = vpow.pop %v1428
    %v1430 = vsel %vm350, %v1427, 0.0
    %1431 = vadd.xlane.f32.xlu0 %v1430
    %v1432 = vpop.xlane.xlu0 %1431
    %v1433 = vsel %vm350, %v1429, 0.0
    %1434 = vadd.xlane.f32.xlu0 %v1433
    %v1435 = vpop.xlane.xlu0 %1434
    %v1436 = vrcp.pop %v1432
    %v1437 = vrcp.pop %v1435
    %v1438 = vmul.f32 %v1427, %v1436
    %v1439 = vmul.f32 %v1429, %v1437
    %v1441 = vsel %vm350, %v1438, 0
    %v1444 = vsel %vm350, %v1439, 0
    %1446 = vmatprep.subr.mxu0 0.0
    %1447 = vmatpush1.msra.mxu0 %v1315
    %1448 = vmatprep.subr.mxu0 0.0
    %1449 = vmatpush1.msra.mxu0 %v1320
    %1450 = vmatprep.subr.mxu0 0.0
    %1451 = vmatpush1.msra.mxu0 0.0
    %1452 = vmatprep.subr.mxu0 0.0
    %1453 = vmatpush1.msra.mxu0 0.0
    %1454 = vmatprep.subr.mxu0 0.0
    %1455 = vmatpush1.msra.mxu0 0.0
    %1456 = vmatprep.subr.mxu0 0.0
    %1457 = vmatpush1.msra.mxu0 0.0
    %1458 = vmatprep.subr.mxu0 0.0
    %1459 = vmatpush1.msra.mxu0 0.0
    %1460 = vmatprep.subr.mxu0 0.0
    %1461 = vmatpush1.msra.mxu0 0.0
    %1462 = vmatprep.subr.mxu0 0.0
    %1463 = vmatpush1.msra.mxu0 0.0
    %1464 = vmatprep.subr.mxu0 0.0
    %1465 = vmatpush1.msra.mxu0 0.0
    %1466 = vmatprep.subr.mxu0 0.0
    %1467 = vmatpush1.msra.mxu0 0.0
    %1468 = vmatprep.subr.mxu0 0.0
    %1469 = vmatpush1.msra.mxu0 0.0
    %1470 = vmatprep.subr.mxu0 0.0
    %1471 = vmatpush1.msra.mxu0 0.0
    %1472 = vmatprep.subr.mxu0 0.0
    %1473 = vmatpush1.msra.mxu0 0.0
    %1474 = vmatprep.subr.mxu0 0.0
    %1475 = vmatpush1.msra.mxu0 0.0
    %1476 = vmatprep.subr.mxu0 0.0
    %1477 = vmatpush1.msra.mxu0 0.0
    %1478 = vmatprep.subr.mxu0 0.0
    %1479 = vmatpush1.msra.mxu0 0.0
    %1480 = vmatprep.subr.mxu0 0.0
    %1481 = vmatpush1.msra.mxu0 0.0
    %1482 = vmatprep.subr.mxu0 0.0
    %1483 = vmatpush1.msra.mxu0 0.0
    %1484 = vmatprep.subr.mxu0 0.0
    %1485 = vmatpush1.msra.mxu0 0.0
    %1486 = vmatprep.subr.mxu0 0.0
    %1487 = vmatpush1.msra.mxu0 0.0
    %1488 = vmatprep.subr.mxu0 0.0
    %1489 = vmatpush1.msra.mxu0 0.0
    %1490 = vmatprep.subr.mxu0 0.0
    %1491 = vmatpush1.msra.mxu0 0.0
    %1492 = vmatprep.subr.mxu0 0.0
    %1493 = vmatpush1.msra.mxu0 0.0
    %1494 = vmatprep.subr.mxu0 0.0
    %1495 = vmatpush1.msra.mxu0 0.0
    %1496 = vmatprep.subr.mxu0 0.0
    %1497 = vmatpush1.msra.mxu0 0.0
    %1498 = vmatprep.subr.mxu0 0.0
    %1499 = vmatpush1.msra.mxu0 0.0
    %1500 = vmatprep.subr.mxu0 0.0
    %1501 = vmatpush1.msra.mxu0 0.0
    %1502 = vmatprep.subr.mxu0 0.0
    %1503 = vmatpush1.msra.mxu0 0.0
    %1504 = vmatprep.subr.mxu0 0.0
    %1505 = vmatpush1.msra.mxu0 0.0
    %1506 = vmatprep.subr.mxu0 0.0
    %1507 = vmatpush1.msra.mxu0 0.0
    %1508 = vmatprep.subr.mxu0 0.0
    %1509 = vmatpush1.msra.mxu0 0.0
    %1510 = vmatprep.mubr.f32.mxu0 0.0
    %1511 = vmatmul.mubr.f32.gmra.mrb[0].mxu0 %v1441
    %v1512 = vpop.f32.mrb[0].mxu0
    %v1513 = vadd.f32 0.0, %v1512
    %v1514 = vpop.f32.mrb[0].mxu0
    %1515 = vmatprep.mubr.f32.mxu0 0.0
    %1516 = vmatmul.mubr.f32.gmra.mrb[0].mxu0 %v1444
    %v1517 = vpop.f32.mrb[0].mxu0
    %v1518 = vadd.f32 0.0, %v1517
    %v1519 = vpop.f32.mrb[0].mxu0
    %1520 = vdwg.mxu0
    %1521 = vrot.lane.b32.xlu0 %v1323, 120
    %v1522 = vpop.permute.xlu0 %1521
    %1523 = vrot.lane.b32.xlu0 %v1324, 120
    %v1524 = vpop.permute.xlu0 %1523
    %1525 = vrot.lane.b32.xlu0 %v1325, 120
    %v1526 = vpop.permute.xlu0 %1525
    %1527 = vrot.lane.b32.xlu0 %v1326, 120
    %v1528 = vpop.permute.xlu0 %1527
    %v1529 = vsel %vm262, %v1522, 0
    %v1531 = vsel %vm262, %v1524, 0
    %v1533 = vsel %vm262, %v1526, 0
    %v1535 = vsel %vm262, %v1528, 0
    %1537 = vmatprep.subr.mxu0 0.0
    %1538 = vmatpush1.xpose.msra.mxu0 %v1533
    %1539 = vmatprep.subr.mxu0 0.0
    %1540 = vmatpush1.xpose.msra.mxu0 %v1535
    %1541 = vmatprep.subr.mxu0 0.0
    %1542 = vmatpush1.xpose.msra.mxu0 0.0
    %1543 = vmatprep.subr.mxu0 0.0
    %1544 = vmatpush1.xpose.msra.mxu0 0.0
    %1545 = vmatprep.subr.mxu0 0.0
    %1546 = vmatpush1.xpose.msra.mxu0 0.0
    %1547 = vmatprep.subr.mxu0 0.0
    %1548 = vmatpush1.xpose.msra.mxu0 0.0
    %1549 = vmatprep.subr.mxu0 0.0
    %1550 = vmatpush1.xpose.msra.mxu0 0.0
    %1551 = vmatprep.subr.mxu0 0.0
    %1552 = vmatpush1.xpose.msra.mxu0 0.0
    %1553 = vmatprep.subr.mxu0 0.0
    %1554 = vmatpush1.xpose.msra.mxu0 0.0
    %1555 = vmatprep.subr.mxu0 0.0
    %1556 = vmatpush1.xpose.msra.mxu0 0.0
    %1557 = vmatprep.subr.mxu0 0.0
    %1558 = vmatpush1.xpose.msra.mxu0 0.0
    %1559 = vmatprep.subr.mxu0 0.0
    %1560 = vmatpush1.xpose.msra.mxu0 0.0
    %1561 = vmatprep.subr.mxu0 0.0
    %1562 = vmatpush1.xpose.msra.mxu0 0.0
    %1563 = vmatprep.subr.mxu0 0.0
    %1564 = vmatpush1.xpose.msra.mxu0 0.0
    %1565 = vmatprep.subr.mxu0 0.0
    %1566 = vmatpush1.xpose.msra.mxu0 0.0
    %1567 = vmatprep.subr.mxu0 0.0
    %1568 = vmatpush1.xpose.msra.mxu0 0.0
    %1569 = vmatprep.subr.mxu0 0.0
    %1570 = vmatpush1.xpose.msra.mxu0 0.0
    %1571 = vmatprep.subr.mxu0 0.0
    %1572 = vmatpush1.xpose.msra.mxu0 0.0
    %1573 = vmatprep.subr.mxu0 0.0
    %1574 = vmatpush1.xpose.msra.mxu0 0.0
    %1575 = vmatprep.subr.mxu0 0.0
    %1576 = vmatpush1.xpose.msra.mxu0 0.0
    %1577 = vmatprep.subr.mxu0 0.0
    %1578 = vmatpush1.xpose.msra.mxu0 0.0
    %1579 = vmatprep.subr.mxu0 0.0
    %1580 = vmatpush1.xpose.msra.mxu0 0.0
    %1581 = vmatprep.subr.mxu0 0.0
    %1582 = vmatpush1.xpose.msra.mxu0 0.0
    %1583 = vmatprep.subr.mxu0 0.0
    %1584 = vmatpush1.xpose.msra.mxu0 0.0
    %1585 = vmatprep.subr.mxu0 0.0
    %1586 = vmatpush1.xpose.msra.mxu0 0.0
    %1587 = vmatprep.subr.mxu0 0.0
    %1588 = vmatpush1.xpose.msra.mxu0 0.0
    %1589 = vmatprep.subr.mxu0 0.0
    %1590 = vmatpush1.xpose.msra.mxu0 0.0
    %1591 = vmatprep.subr.mxu0 0.0
    %1592 = vmatpush1.xpose.msra.mxu0 0.0
    %1593 = vmatprep.subr.mxu0 0.0
    %1594 = vmatpush1.xpose.msra.mxu0 0.0
    %1595 = vmatprep.subr.mxu0 0.0
    %1596 = vmatpush1.xpose.msra.mxu0 0.0
    %1597 = vmatprep.subr.mxu0 0.0
    %1598 = vmatpush1.xpose.msra.mxu0 0.0
    %1599 = vmatprep.subr.mxu0 0.0
    %1600 = vmatpush1.xpose.msra.mxu0 0.0
    %1601 = vmatprep.mubr.f32.mxu0 0.0
    %1602 = vmatmul.mubr.f32.gmra.mrb[0].mxu0 %v1529
    %v1603 = vpop.f32.mrb[0].mxu0
    %v1604 = vadd.f32 0.0, %v1603
    %v1605 = vpop.f32.mrb[0].mxu0
    %1606 = vmatprep.mubr.f32.mxu0 0.0
    %1607 = vmatmul.mubr.f32.gmra.mrb[0].mxu0 %v1531
    %v1608 = vpop.f32.mrb[0].mxu0
    %v1609 = vadd.f32 0.0, %v1608
    %v1610 = vpop.f32.mrb[0].mxu0
    %1611 = vdwg.mxu0
    %v1612 = vmul.f32 %v1604, 0.35355338
    %v1613 = vmul.f32 %v1609, 0.35355338
    %v1614 = vadd.f32 %v1612, %v119
    %v1615 = vadd.f32 %v1613, %v120
    %v1616 = vsel %vm350, %v1614, -inf
    %1617 = vmax.xlane.f32.xlu0 %v1616
    %v1618 = vpop.xlane.xlu0 %1617
    %v1619 = vsel %vm350, %v1615, -inf
    %1620 = vmax.xlane.f32.xlu0 %v1619
    %v1621 = vpop.xlane.xlu0 %1620
    %v1622 = vsub.f32 %v1614, %v1618
    %v1623 = vsub.f32 %v1615, %v1621
    %v1624 = vmul.f32 %v1622, 1.442695
    %v1625 = vpow.pop %v1624
    %v1626 = vmul.f32 %v1623, 1.442695
    %v1627 = vpow.pop %v1626
    %v1628 = vsel %vm350, %v1625, 0.0
    %1629 = vadd.xlane.f32.xlu0 %v1628
    %v1630 = vpop.xlane.xlu0 %1629
    %v1631 = vsel %vm350, %v1627, 0.0
    %1632 = vadd.xlane.f32.xlu0 %v1631
    %v1633 = vpop.xlane.xlu0 %1632
    %v1634 = vrcp.pop %v1630
    %v1635 = vrcp.pop %v1633
    %v1636 = vmul.f32 %v1625, %v1634
    %v1637 = vmul.f32 %v1627, %v1635
    %1640 = vrot.lane.b32.xlu0 %v1315, 120
    %v1641 = vpop.permute.xlu0 %1640
    %1642 = vrot.lane.b32.xlu0 %v1320, 120
    %v1643 = vpop.permute.xlu0 %1642
    %v1647 = vsel %vm350, %v1636, 0
    %v1650 = vsel %vm350, %v1637, 0
    %1652 = vmatprep.subr.mxu0 0.0
    %1653 = vmatpush1.msra.mxu0 %v1641
    %1654 = vmatprep.subr.mxu0 0.0
    %1655 = vmatpush1.msra.mxu0 %v1643
    %1656 = vmatprep.subr.mxu0 0.0
    %1657 = vmatpush1.msra.mxu0 0.0
    %1658 = vmatprep.subr.mxu0 0.0
    %1659 = vmatpush1.msra.mxu0 0.0
    %1660 = vmatprep.subr.mxu0 0.0
    %1661 = vmatpush1.msra.mxu0 0.0
    %1662 = vmatprep.subr.mxu0 0.0
    %1663 = vmatpush1.msra.mxu0 0.0
    %1664 = vmatprep.subr.mxu0 0.0
    %1665 = vmatpush1.msra.mxu0 0.0
    %1666 = vmatprep.subr.mxu0 0.0
    %1667 = vmatpush1.msra.mxu0 0.0
    %1668 = vmatprep.subr.mxu0 0.0
    %1669 = vmatpush1.msra.mxu0 0.0
    %1670 = vmatprep.subr.mxu0 0.0
    %1671 = vmatpush1.msra.mxu0 0.0
    %1672 = vmatprep.subr.mxu0 0.0
    %1673 = vmatpush1.msra.mxu0 0.0
    %1674 = vmatprep.subr.mxu0 0.0
    %1675 = vmatpush1.msra.mxu0 0.0
    %1676 = vmatprep.subr.mxu0 0.0
    %1677 = vmatpush1.msra.mxu0 0.0
    %1678 = vmatprep.subr.mxu0 0.0
    %1679 = vmatpush1.msra.mxu0 0.0
    %1680 = vmatprep.subr.mxu0 0.0
    %1681 = vmatpush1.msra.mxu0 0.0
    %1682 = vmatprep.subr.mxu0 0.0
    %1683 = vmatpush1.msra.mxu0 0.0
    %1684 = vmatprep.subr.mxu0 0.0
    %1685 = vmatpush1.msra.mxu0 0.0
    %1686 = vmatprep.subr.mxu0 0.0
    %1687 = vmatpush1.msra.mxu0 0.0
    %1688 = vmatprep.subr.mxu0 0.0
    %1689 = vmatpush1.msra.mxu0 0.0
    %1690 = vmatprep.subr.mxu0 0.0
    %1691 = vmatpush1.msra.mxu0 0.0
    %1692 = vmatprep.subr.mxu0 0.0
    %1693 = vmatpush1.msra.mxu0 0.0
    %1694 = vmatprep.subr.mxu0 0.0
    %1695 = vmatpush1.msra.mxu0 0.0
    %1696 = vmatprep.subr.mxu0 0.0
    %1697 = vmatpush1.msra.mxu0 0.0
    %1698 = vmatprep.subr.mxu0 0.0
    %1699 = vmatpush1.msra.mxu0 0.0
    %1700 = vmatprep.subr.mxu0 0.0
    %1701 = vmatpush1.msra.mxu0 0.0
    %1702 = vmatprep.subr.mxu0 0.0
    %1703 = vmatpush1.msra.mxu0 0.0
    %1704 = vmatprep.subr.mxu0 0.0
    %1705 = vmatpush1.msra.mxu0 0.0
    %1706 = vmatprep.subr.mxu0 0.0
    %1707 = vmatpush1.msra.mxu0 0.0
    %1708 = vmatprep.subr.mxu0 0.0
    %1709 = vmatpush1.msra.mxu0 0.0
    %1710 = vmatprep.subr.mxu0 0.0
    %1711 = vmatpush1.msra.mxu0 0.0
    %1712 = vmatprep.subr.mxu0 0.0
    %1713 = vmatpush1.msra.mxu0 0.0
    %1714 = vmatprep.subr.mxu0 0.0
    %1715 = vmatpush1.msra.mxu0 0.0
    %1716 = vmatprep.mubr.f32.mxu0 0.0
    %1717 = vmatmul.mubr.f32.gmra.mrb[0].mxu0 %v1647
    %v1718 = vpop.f32.mrb[0].mxu0
    %v1719 = vadd.f32 0.0, %v1718
    %v1720 = vpop.f32.mrb[0].mxu0
    %1721 = vmatprep.mubr.f32.mxu0 0.0
    %1722 = vmatmul.mubr.f32.gmra.mrb[0].mxu0 %v1650
    %v1723 = vpop.f32.mrb[0].mxu0
    %v1724 = vadd.f32 0.0, %v1723
    %v1725 = vpop.f32.mrb[0].mxu0
    %1726 = vdwg.mxu0
    %1727 = vrot.lane.b32.xlu0 %v1323, 112
    %v1728 = vpop.permute.xlu0 %1727
    %1729 = vrot.lane.b32.xlu0 %v1324, 112
    %v1730 = vpop.permute.xlu0 %1729
    %1731 = vrot.lane.b32.xlu0 %v1325, 112
    %v1732 = vpop.permute.xlu0 %1731
    %1733 = vrot.lane.b32.xlu0 %v1326, 112
    %v1734 = vpop.permute.xlu0 %1733
    %v1735 = vsel %vm262, %v1728, 0
    %v1737 = vsel %vm262, %v1730, 0
    %v1739 = vsel %vm262, %v1732, 0
    %v1741 = vsel %vm262, %v1734, 0
    %1743 = vmatprep.subr.mxu0 0.0
    %1744 = vmatpush1.xpose.msra.mxu0 %v1739
    %1745 = vmatprep.subr.mxu0 0.0
    %1746 = vmatpush1.xpose.msra.mxu0 %v1741
    %1747 = vmatprep.subr.mxu0 0.0
    %1748 = vmatpush1.xpose.msra.mxu0 0.0
    %1749 = vmatprep.subr.mxu0 0.0
    %1750 = vmatpush1.xpose.msra.mxu0 0.0
    %1751 = vmatprep.subr.mxu0 0.0
    %1752 = vmatpush1.xpose.msra.mxu0 0.0
    %1753 = vmatprep.subr.mxu0 0.0
    %1754 = vmatpush1.xpose.msra.mxu0 0.0
    %1755 = vmatprep.subr.mxu0 0.0
    %1756 = vmatpush1.xpose.msra.mxu0 0.0
    %1757 = vmatprep.subr.mxu0 0.0
    %1758 = vmatpush1.xpose.msra.mxu0 0.0
    %1759 = vmatprep.subr.mxu0 0.0
    %1760 = vmatpush1.xpose.msra.mxu0 0.0
    %1761 = vmatprep.subr.mxu0 0.0
    %1762 = vmatpush1.xpose.msra.mxu0 0.0
    %1763 = vmatprep.subr.mxu0 0.0
    %1764 = vmatpush1.xpose.msra.mxu0 0.0
    %1765 = vmatprep.subr.mxu0 0.0
    %1766 = vmatpush1.xpose.msra.mxu0 0.0
    %1767 = vmatprep.subr.mxu0 0.0
    %1768 = vmatpush1.xpose.msra.mxu0 0.0
    %1769 = vmatprep.subr.mxu0 0.0
    %1770 = vmatpush1.xpose.msra.mxu0 0.0
    %1771 = vmatprep.subr.mxu0 0.0
    %1772 = vmatpush1.xpose.msra.mxu0 0.0
    %1773 = vmatprep.subr.mxu0 0.0
    %1774 = vmatpush1.xpose.msra.mxu0 0.0
    %1775 = vmatprep.subr.mxu0 0.0
    %1776 = vmatpush1.xpose.msra.mxu0 0.0
    %1777 = vmatprep.subr.mxu0 0.0
    %1778 = vmatpush1.xpose.msra.mxu0 0.0
    %1779 = vmatprep.subr.mxu0 0.0
    %1780 = vmatpush1.xpose.msra.mxu0 0.0
    %1781 = vmatprep.subr.mxu0 0.0
    %1782 = vmatpush1.xpose.msra.mxu0 0.0
    %1783 = vmatprep.subr.mxu0 0.0
    %1784 = vmatpush1.xpose.msra.mxu0 0.0
    %1785 = vmatprep.subr.mxu0 0.0
    %1786 = vmatpush1.xpose.msra.mxu0 0.0
    %1787 = vmatprep.subr.mxu0 0.0
    %1788 = vmatpush1.xpose.msra.mxu0 0.0
    %1789 = vmatprep.subr.mxu0 0.0
    %1790 = vmatpush1.xpose.msra.mxu0 0.0
    %1791 = vmatprep.subr.mxu0 0.0
    %1792 = vmatpush1.xpose.msra.mxu0 0.0
    %1793 = vmatprep.subr.mxu0 0.0
    %1794 = vmatpush1.xpose.msra.mxu0 0.0
    %1795 = vmatprep.subr.mxu0 0.0
    %1796 = vmatpush1.xpose.msra.mxu0 0.0
    %1797 = vmatprep.subr.mxu0 0.0
    %1798 = vmatpush1.xpose.msra.mxu0 0.0
    %1799 = vmatprep.subr.mxu0 0.0
    %1800 = vmatpush1.xpose.msra.mxu0 0.0
    %1801 = vmatprep.subr.mxu0 0.0
    %1802 = vmatpush1.xpose.msra.mxu0 0.0
    %1803 = vmatprep.subr.mxu0 0.0
    %1804 = vmatpush1.xpose.msra.mxu0 0.0
    %1805 = vmatprep.subr.mxu0 0.0
    %1806 = vmatpush1.xpose.msra.mxu0 0.0
    %1807 = vmatprep.mubr.f32.mxu0 0.0
    %1808 = vmatmul.mubr.f32.gmra.mrb[0].mxu0 %v1735
    %v1809 = vpop.f32.mrb[0].mxu0
    %v1810 = vadd.f32 0.0, %v1809
    %v1811 = vpop.f32.mrb[0].mxu0
    %1812 = vmatprep.mubr.f32.mxu0 0.0
    %1813 = vmatmul.mubr.f32.gmra.mrb[0].mxu0 %v1737
    %v1814 = vpop.f32.mrb[0].mxu0
    %v1815 = vadd.f32 0.0, %v1814
    %v1816 = vpop.f32.mrb[0].mxu0
    %1817 = vdwg.mxu0
    %v1818 = vmul.f32 %v1810, 0.35355338
    %v1819 = vmul.f32 %v1815, 0.35355338
    %v1820 = vadd.f32 %v1818, %v119
    %v1821 = vadd.f32 %v1819, %v120
    %v1822 = vsel %vm350, %v1820, -inf
    %1823 = vmax.xlane.f32.xlu0 %v1822
    %v1824 = vpop.xlane.xlu0 %1823
    %v1825 = vsel %vm350, %v1821, -inf
    %1826 = vmax.xlane.f32.xlu0 %v1825
    %v1827 = vpop.xlane.xlu0 %1826
    %v1828 = vsub.f32 %v1820, %v1824
    %v1829 = vsub.f32 %v1821, %v1827
    %v1830 = vmul.f32 %v1828, 1.442695
    %v1831 = vpow.pop %v1830
    %v1832 = vmul.f32 %v1829, 1.442695
    %v1833 = vpow.pop %v1832
    %v1834 = vsel %vm350, %v1831, 0.0
    %1835 = vadd.xlane.f32.xlu0 %v1834
    %v1836 = vpop.xlane.xlu0 %1835
    %v1837 = vsel %vm350, %v1833, 0.0
    %1838 = vadd.xlane.f32.xlu0 %v1837
    %v1839 = vpop.xlane.xlu0 %1838
    %v1840 = vrcp.pop %v1836
    %v1841 = vrcp.pop %v1839
    %v1842 = vmul.f32 %v1831, %v1840
    %v1843 = vmul.f32 %v1833, %v1841
    %1844 = vrot.lane.b32.xlu0 %v1315, 112
    %v1845 = vpop.permute.xlu0 %1844
    %1846 = vrot.lane.b32.xlu0 %v1320, 112
    %v1847 = vpop.permute.xlu0 %1846
    %v1851 = vsel %vm350, %v1842, 0
    %v1854 = vsel %vm350, %v1843, 0
    %1856 = vmatprep.subr.mxu0 0.0
    %1857 = vmatpush1.msra.mxu0 %v1845
    %1858 = vmatprep.subr.mxu0 0.0
    %1859 = vmatpush1.msra.mxu0 %v1847
    %1860 = vmatprep.subr.mxu0 0.0
    %1861 = vmatpush1.msra.mxu0 0.0
    %1862 = vmatprep.subr.mxu0 0.0
    %1863 = vmatpush1.msra.mxu0 0.0
    %1864 = vmatprep.subr.mxu0 0.0
    %1865 = vmatpush1.msra.mxu0 0.0
    %1866 = vmatprep.subr.mxu0 0.0
    %1867 = vmatpush1.msra.mxu0 0.0
    %1868 = vmatprep.subr.mxu0 0.0
    %1869 = vmatpush1.msra.mxu0 0.0
    %1870 = vmatprep.subr.mxu0 0.0
    %1871 = vmatpush1.msra.mxu0 0.0
    %1872 = vmatprep.subr.mxu0 0.0
    %1873 = vmatpush1.msra.mxu0 0.0
    %1874 = vmatprep.subr.mxu0 0.0
    %1875 = vmatpush1.msra.mxu0 0.0
    %1876 = vmatprep.subr.mxu0 0.0
    %1877 = vmatpush1.msra.mxu0 0.0
    %1878 = vmatprep.subr.mxu0 0.0
    %1879 = vmatpush1.msra.mxu0 0.0
    %1880 = vmatprep.subr.mxu0 0.0
    %1881 = vmatpush1.msra.mxu0 0.0
    %1882 = vmatprep.subr.mxu0 0.0
    %1883 = vmatpush1.msra.mxu0 0.0
    %1884 = vmatprep.subr.mxu0 0.0
    %1885 = vmatpush1.msra.mxu0 0.0
    %1886 = vmatprep.subr.mxu0 0.0
    %1887 = vmatpush1.msra.mxu0 0.0
    %1888 = vmatprep.subr.mxu0 0.0
    %1889 = vmatpush1.msra.mxu0 0.0
    %1890 = vmatprep.subr.mxu0 0.0
    %1891 = vmatpush1.msra.mxu0 0.0
    %1892 = vmatprep.subr.mxu0 0.0
    %1893 = vmatpush1.msra.mxu0 0.0
    %1894 = vmatprep.subr.mxu0 0.0
    %1895 = vmatpush1.msra.mxu0 0.0
    %1896 = vmatprep.subr.mxu0 0.0
    %1897 = vmatpush1.msra.mxu0 0.0
    %1898 = vmatprep.subr.mxu0 0.0
    %1899 = vmatpush1.msra.mxu0 0.0
    %1900 = vmatprep.subr.mxu0 0.0
    %1901 = vmatpush1.msra.mxu0 0.0
    %1902 = vmatprep.subr.mxu0 0.0
    %1903 = vmatpush1.msra.mxu0 0.0
    %1904 = vmatprep.subr.mxu0 0.0
    %1905 = vmatpush1.msra.mxu0 0.0
    %1906 = vmatprep.subr.mxu0 0.0
    %1907 = vmatpush1.msra.mxu0 0.0
    %1908 = vmatprep.subr.mxu0 0.0
    %1909 = vmatpush1.msra.mxu0 0.0
    %1910 = vmatprep.subr.mxu0 0.0
    %1911 = vmatpush1.msra.mxu0 0.0
    %1912 = vmatprep.subr.mxu0 0.0
    %1913 = vmatpush1.msra.mxu0 0.0
    %1914 = vmatprep.subr.mxu0 0.0
    %1915 = vmatpush1.msra.mxu0 0.0
    %1916 = vmatprep.subr.mxu0 0.0
    %1917 = vmatpush1.msra.mxu0 0.0
    %1918 = vmatprep.subr.mxu0 0.0
    %1919 = vmatpush1.msra.mxu0 0.0
    %1920 = vmatprep.mubr.f32.mxu0 0.0
    %1921 = vmatmul.mubr.f32.gmra.mrb[0].mxu0 %v1851
    %v1922 = vpop.f32.mrb[0].mxu0
    %v1923 = vadd.f32 0.0, %v1922
    %v1924 = vpop.f32.mrb[0].mxu0
    %1925 = vmatprep.mubr.f32.mxu0 0.0
    %1926 = vmatmul.mubr.f32.gmra.mrb[0].mxu0 %v1854
    %v1927 = vpop.f32.mrb[0].mxu0
    %v1928 = vadd.f32 0.0, %v1927
    %v1929 = vpop.f32.mrb[0].mxu0
    %1930 = vdwg.mxu0
    %1931 = vrot.lane.b32.xlu0 %v1323, 104
    %v1932 = vpop.permute.xlu0 %1931
    %1933 = vrot.lane.b32.xlu0 %v1324, 104
    %v1934 = vpop.permute.xlu0 %1933
    %1935 = vrot.lane.b32.xlu0 %v1325, 104
    %v1936 = vpop.permute.xlu0 %1935
    %1937 = vrot.lane.b32.xlu0 %v1326, 104
    %v1938 = vpop.permute.xlu0 %1937
    %v1939 = vsel %vm262, %v1932, 0
    %v1941 = vsel %vm262, %v1934, 0
    %v1943 = vsel %vm262, %v1936, 0
    %v1945 = vsel %vm262, %v1938, 0
    %1947 = vmatprep.subr.mxu0 0.0
    %1948 = vmatpush1.xpose.msra.mxu0 %v1943
    %1949 = vmatprep.subr.mxu0 0.0
    %1950 = vmatpush1.xpose.msra.mxu0 %v1945
    %1951 = vmatprep.subr.mxu0 0.0
    %1952 = vmatpush1.xpose.msra.mxu0 0.0
    %1953 = vmatprep.subr.mxu0 0.0
    %1954 = vmatpush1.xpose.msra.mxu0 0.0
    %1955 = vmatprep.subr.mxu0 0.0
    %1956 = vmatpush1.xpose.msra.mxu0 0.0
    %1957 = vmatprep.subr.mxu0 0.0
    %1958 = vmatpush1.xpose.msra.mxu0 0.0
    %1959 = vmatprep.subr.mxu0 0.0
    %1960 = vmatpush1.xpose.msra.mxu0 0.0
    %1961 = vmatprep.subr.mxu0 0.0
    %1962 = vmatpush1.xpose.msra.mxu0 0.0
    %1963 = vmatprep.subr.mxu0 0.0
    %1964 = vmatpush1.xpose.msra.mxu0 0.0
    %1965 = vmatprep.subr.mxu0 0.0
    %1966 = vmatpush1.xpose.msra.mxu0 0.0
    %1967 = vmatprep.subr.mxu0 0.0
    %1968 = vmatpush1.xpose.msra.mxu0 0.0
    %1969 = vmatprep.subr.mxu0 0.0
    %1970 = vmatpush1.xpose.msra.mxu0 0.0
    %1971 = vmatprep.subr.mxu0 0.0
    %1972 = vmatpush1.xpose.msra.mxu0 0.0
    %1973 = vmatprep.subr.mxu0 0.0
    %1974 = vmatpush1.xpose.msra.mxu0 0.0
    %1975 = vmatprep.subr.mxu0 0.0
    %1976 = vmatpush1.xpose.msra.mxu0 0.0
    %1977 = vmatprep.subr.mxu0 0.0
    %1978 = vmatpush1.xpose.msra.mxu0 0.0
    %1979 = vmatprep.subr.mxu0 0.0
    %1980 = vmatpush1.xpose.msra.mxu0 0.0
    %1981 = vmatprep.subr.mxu0 0.0
    %1982 = vmatpush1.xpose.msra.mxu0 0.0
    %1983 = vmatprep.subr.mxu0 0.0
    %1984 = vmatpush1.xpose.msra.mxu0 0.0
    %1985 = vmatprep.subr.mxu0 0.0
    %1986 = vmatpush1.xpose.msra.mxu0 0.0
    %1987 = vmatprep.subr.mxu0 0.0
    %1988 = vmatpush1.xpose.msra.mxu0 0.0
    %1989 = vmatprep.subr.mxu0 0.0
    %1990 = vmatpush1.xpose.msra.mxu0 0.0
    %1991 = vmatprep.subr.mxu0 0.0
    %1992 = vmatpush1.xpose.msra.mxu0 0.0
    %1993 = vmatprep.subr.mxu0 0.0
    %1994 = vmatpush1.xpose.msra.mxu0 0.0
    %1995 = vmatprep.subr.mxu0 0.0
    %1996 = vmatpush1.xpose.msra.mxu0 0.0
    %1997 = vmatprep.subr.mxu0 0.0
    %1998 = vmatpush1.xpose.msra.mxu0 0.0
    %1999 = vmatprep.subr.mxu0 0.0
    %2000 = vmatpush1.xpose.msra.mxu0 0.0
    %2001 = vmatprep.subr.mxu0 0.0
    %2002 = vmatpush1.xpose.msra.mxu0 0.0
    %2003 = vmatprep.subr.mxu0 0.0
    %2004 = vmatpush1.xpose.msra.mxu0 0.0
    %2005 = vmatprep.subr.mxu0 0.0
    %2006 = vmatpush1.xpose.msra.mxu0 0.0
    %2007 = vmatprep.subr.mxu0 0.0
    %2008 = vmatpush1.xpose.msra.mxu0 0.0
    %2009 = vmatprep.subr.mxu0 0.0
    %2010 = vmatpush1.xpose.msra.mxu0 0.0
    %2011 = vmatprep.mubr.f32.mxu0 0.0
    %2012 = vmatmul.mubr.f32.gmra.mrb[0].mxu0 %v1939
    %v2013 = vpop.f32.mrb[0].mxu0
    %v2014 = vadd.f32 0.0, %v2013
    %v2015 = vpop.f32.mrb[0].mxu0
    %2016 = vmatprep.mubr.f32.mxu0 0.0
    %2017 = vmatmul.mubr.f32.gmra.mrb[0].mxu0 %v1941
    %v2018 = vpop.f32.mrb[0].mxu0
    %v2019 = vadd.f32 0.0, %v2018
    %v2020 = vpop.f32.mrb[0].mxu0
    %2021 = vdwg.mxu0
    %v2022 = vmul.f32 %v2014, 0.35355338
    %v2023 = vmul.f32 %v2019, 0.35355338
    %v2024 = vadd.f32 %v2022, %v119
    %v2025 = vadd.f32 %v2023, %v120
    %v2026 = vsel %vm350, %v2024, -inf
    %2027 = vmax.xlane.f32.xlu0 %v2026
    %v2028 = vpop.xlane.xlu0 %2027
    %v2029 = vsel %vm350, %v2025, -inf
    %2030 = vmax.xlane.f32.xlu0 %v2029
    %v2031 = vpop.xlane.xlu0 %2030
    %v2032 = vsub.f32 %v2024, %v2028
    %v2033 = vsub.f32 %v2025, %v2031
    %v2034 = vmul.f32 %v2032, 1.442695
    %v2035 = vpow.pop %v2034
    %v2036 = vmul.f32 %v2033, 1.442695
    %v2037 = vpow.pop %v2036
    %v2038 = vsel %vm350, %v2035, 0.0
    %2039 = vadd.xlane.f32.xlu0 %v2038
    %v2040 = vpop.xlane.xlu0 %2039
    %v2041 = vsel %vm350, %v2037, 0.0
    %2042 = vadd.xlane.f32.xlu0 %v2041
    %v2043 = vpop.xlane.xlu0 %2042
    %v2044 = vrcp.pop %v2040
    %v2045 = vrcp.pop %v2043
    %v2046 = vmul.f32 %v2035, %v2044
    %v2047 = vmul.f32 %v2037, %v2045
    %2048 = vrot.lane.b32.xlu0 %v1315, 104
    %v2049 = vpop.permute.xlu0 %2048
    %2050 = vrot.lane.b32.xlu0 %v1320, 104
    %v2051 = vpop.permute.xlu0 %2050
    %v2055 = vsel %vm350, %v2046, 0
    %v2058 = vsel %vm350, %v2047, 0
    %2060 = vmatprep.subr.mxu0 0.0
    %2061 = vmatpush1.msra.mxu0 %v2049
    %2062 = vmatprep.subr.mxu0 0.0
    %2063 = vmatpush1.msra.mxu0 %v2051
    %2064 = vmatprep.subr.mxu0 0.0
    %2065 = vmatpush1.msra.mxu0 0.0
    %2066 = vmatprep.subr.mxu0 0.0
    %2067 = vmatpush1.msra.mxu0 0.0
    %2068 = vmatprep.subr.mxu0 0.0
    %2069 = vmatpush1.msra.mxu0 0.0
    %2070 = vmatprep.subr.mxu0 0.0
    %2071 = vmatpush1.msra.mxu0 0.0
    %2072 = vmatprep.subr.mxu0 0.0
    %2073 = vmatpush1.msra.mxu0 0.0
    %2074 = vmatprep.subr.mxu0 0.0
    %2075 = vmatpush1.msra.mxu0 0.0
    %2076 = vmatprep.subr.mxu0 0.0
    %2077 = vmatpush1.msra.mxu0 0.0
    %2078 = vmatprep.subr.mxu0 0.0
    %2079 = vmatpush1.msra.mxu0 0.0
    %2080 = vmatprep.subr.mxu0 0.0
    %2081 = vmatpush1.msra.mxu0 0.0
    %2082 = vmatprep.subr.mxu0 0.0
    %2083 = vmatpush1.msra.mxu0 0.0
    %2084 = vmatprep.subr.mxu0 0.0
    %2085 = vmatpush1.msra.mxu0 0.0
    %2086 = vmatprep.subr.mxu0 0.0
    %2087 = vmatpush1.msra.mxu0 0.0
    %2088 = vmatprep.subr.mxu0 0.0
    %2089 = vmatpush1.msra.mxu0 0.0
    %2090 = vmatprep.subr.mxu0 0.0
    %2091 = vmatpush1.msra.mxu0 0.0
    %2092 = vmatprep.subr.mxu0 0.0
    %2093 = vmatpush1.msra.mxu0 0.0
    %2094 = vmatprep.subr.mxu0 0.0
    %2095 = vmatpush1.msra.mxu0 0.0
    %2096 = vmatprep.subr.mxu0 0.0
    %2097 = vmatpush1.msra.mxu0 0.0
    %2098 = vmatprep.subr.mxu0 0.0
    %2099 = vmatpush1.msra.mxu0 0.0
    %2100 = vmatprep.subr.mxu0 0.0
    %2101 = vmatpush1.msra.mxu0 0.0
    %2102 = vmatprep.subr.mxu0 0.0
    %2103 = vmatpush1.msra.mxu0 0.0
    %2104 = vmatprep.subr.mxu0 0.0
    %2105 = vmatpush1.msra.mxu0 0.0
    %2106 = vmatprep.subr.mxu0 0.0
    %2107 = vmatpush1.msra.mxu0 0.0
    %2108 = vmatprep.subr.mxu0 0.0
    %2109 = vmatpush1.msra.mxu0 0.0
    %2110 = vmatprep.subr.mxu0 0.0
    %2111 = vmatpush1.msra.mxu0 0.0
    %2112 = vmatprep.subr.mxu0 0.0
    %2113 = vmatpush1.msra.mxu0 0.0
    %2114 = vmatprep.subr.mxu0 0.0
    %2115 = vmatpush1.msra.mxu0 0.0
    %2116 = vmatprep.subr.mxu0 0.0
    %2117 = vmatpush1.msra.mxu0 0.0
    %2118 = vmatprep.subr.mxu0 0.0
    %2119 = vmatpush1.msra.mxu0 0.0
    %2120 = vmatprep.subr.mxu0 0.0
    %2121 = vmatpush1.msra.mxu0 0.0
    %2122 = vmatprep.subr.mxu0 0.0
    %2123 = vmatpush1.msra.mxu0 0.0
    %2124 = vmatprep.mubr.f32.mxu0 0.0
    %2125 = vmatmul.mubr.f32.gmra.mrb[0].mxu0 %v2055
    %v2126 = vpop.f32.mrb[0].mxu0
    %v2127 = vadd.f32 0.0, %v2126
    %v2128 = vpop.f32.mrb[0].mxu0
    %2129 = vmatprep.mubr.f32.mxu0 0.0
    %2130 = vmatmul.mubr.f32.gmra.mrb[0].mxu0 %v2058
    %v2131 = vpop.f32.mrb[0].mxu0
    %v2132 = vadd.f32 0.0, %v2131
    %v2133 = vpop.f32.mrb[0].mxu0
    %2134 = vdwg.mxu0
    %2137 = vrot.lane.b32.xlu0 %v1719, 8
    %v2138 = vpop.permute.xlu0 %2137
    %2139 = vrot.lane.b32.xlu0 %v1724, 8
    %v2140 = vpop.permute.xlu0 %2139
    %2145 = vrot.lane.b32.xlu0 %v1923, 16
    %v2146 = vpop.permute.xlu0 %2145
    %2147 = vrot.lane.b32.xlu0 %v1928, 16
    %v2148 = vpop.permute.xlu0 %2147
    %2153 = vrot.lane.b32.xlu0 %v2127, 24
    %v2154 = vpop.permute.xlu0 %2153
    %2155 = vrot.lane.b32.xlu0 %v2132, 24
    %v2156 = vpop.permute.xlu0 %2155
    %v2159 = vsel %vm262, %v1513, %v2138
    %v2160 = vsel %vm262, %v1518, %v2140
    %v2161 = vsel %vm350, %v2159, %v2146
    %v2162 = vsel %vm350, %v2160, %v2148
    %v2163 = vsel %vm1100, %v2161, %v2154
    %v2164 = vsel %vm1100, %v2162, %v2156
    %v2165 = vld [vmem:[%s10] sm:$0xff]
    %v2166 = vld [vmem:[%s10 + $0x8] sm:$0xff]
    %v2167 = vld [vmem:[%s10 + $0x10] sm:$0xff]
    %v2168 = vld [vmem:[%s10 + $0x18] sm:$0xff]
    %v2170 = vsel %vm123, %v2163, 0
    %v2173 = vsel %vm123, %v2164, 0
    %2175 = vmatprep.subr.mxu0 0.0
    %2176 = vmatpush1.msra.mxu0 %v2165
    %2177 = vmatprep.subr.mxu0 0.0
    %2178 = vmatpush1.msra.mxu0 %v2166
    %2179 = vmatprep.subr.mxu0 0.0
    %2180 = vmatpush1.msra.mxu0 %v2167
    %2181 = vmatprep.subr.mxu0 0.0
    %2182 = vmatpush1.msra.mxu0 %v2168
    %2183 = vmatprep.subr.mxu0 0.0
    %2184 = vmatpush1.msra.mxu0 0.0
    %2185 = vmatprep.subr.mxu0 0.0
    %2186 = vmatpush1.msra.mxu0 0.0
    %2187 = vmatprep.subr.mxu0 0.0
    %2188 = vmatpush1.msra.mxu0 0.0
    %2189 = vmatprep.subr.mxu0 0.0
    %2190 = vmatpush1.msra.mxu0 0.0
    %2191 = vmatprep.subr.mxu0 0.0
    %2192 = vmatpush1.msra.mxu0 0.0
    %2193 = vmatprep.subr.mxu0 0.0
    %2194 = vmatpush1.msra.mxu0 0.0
    %2195 = vmatprep.subr.mxu0 0.0
    %2196 = vmatpush1.msra.mxu0 0.0
    %2197 = vmatprep.subr.mxu0 0.0
    %2198 = vmatpush1.msra.mxu0 0.0
    %2199 = vmatprep.subr.mxu0 0.0
    %2200 = vmatpush1.msra.mxu0 0.0
    %2201 = vmatprep.subr.mxu0 0.0
    %2202 = vmatpush1.msra.mxu0 0.0
    %2203 = vmatprep.subr.mxu0 0.0
    %2204 = vmatpush1.msra.mxu0 0.0
    %2205 = vmatprep.subr.mxu0 0.0
    %2206 = vmatpush1.msra.mxu0 0.0
    %2207 = vmatprep.subr.mxu0 0.0
    %2208 = vmatpush1.msra.mxu0 0.0
    %2209 = vmatprep.subr.mxu0 0.0
    %2210 = vmatpush1.msra.mxu0 0.0
    %2211 = vmatprep.subr.mxu0 0.0
    %2212 = vmatpush1.msra.mxu0 0.0
    %2213 = vmatprep.subr.mxu0 0.0
    %2214 = vmatpush1.msra.mxu0 0.0
    %2215 = vmatprep.subr.mxu0 0.0
    %2216 = vmatpush1.msra.mxu0 0.0
    %2217 = vmatprep.subr.mxu0 0.0
    %2218 = vmatpush1.msra.mxu0 0.0
    %2219 = vmatprep.subr.mxu0 0.0
    %2220 = vmatpush1.msra.mxu0 0.0
    %2221 = vmatprep.subr.mxu0 0.0
    %2222 = vmatpush1.msra.mxu0 0.0
    %2223 = vmatprep.subr.mxu0 0.0
    %2224 = vmatpush1.msra.mxu0 0.0
    %2225 = vmatprep.subr.mxu0 0.0
    %2226 = vmatpush1.msra.mxu0 0.0
    %2227 = vmatprep.subr.mxu0 0.0
    %2228 = vmatpush1.msra.mxu0 0.0
    %2229 = vmatprep.subr.mxu0 0.0
    %2230 = vmatpush1.msra.mxu0 0.0
    %2231 = vmatprep.subr.mxu0 0.0
    %2232 = vmatpush1.msra.mxu0 0.0
    %2233 = vmatprep.subr.mxu0 0.0
    %2234 = vmatpush1.msra.mxu0 0.0
    %2235 = vmatprep.subr.mxu0 0.0
    %2236 = vmatpush1.msra.mxu0 0.0
    %2237 = vmatprep.subr.mxu0 0.0
    %2238 = vmatpush1.msra.mxu0 0.0
    %2239 = vmatprep.mubr.f32.mxu0 0.0
    %2240 = vmatmul.mubr.f32.gmra.mrb[0].mxu0 %v2170
    %v2241 = vpop.f32.mrb[0].mxu0
    %v2242 = vadd.f32 0.0, %v2241
    %v2243 = vpop.f32.mrb[0].mxu0
    %2244 = vmatprep.mubr.f32.mxu0 0.0
    %2245 = vmatmul.mubr.f32.gmra.mrb[0].mxu0 %v2173
    %v2246 = vpop.f32.mrb[0].mxu0
    %v2247 = vadd.f32 0.0, %v2246
    %v2248 = vpop.f32.mrb[0].mxu0
    %2249 = vdwg.mxu0
    %v2250 = vadd.f32 %v1188, %v2242
    %v2251 = vadd.f32 %v1189, %v2247
    %v2252 = vld [vmem:[%s11] sm:$0x1]
    %v2253 = vld [vmem:[%s12] sm:$0x1]
    %v2254 = vsel %vm123, %v2250, 0.0
    %2255 = vadd.xlane.f32.xlu0 %v2254
    %v2256 = vpop.xlane.xlu0 %2255
    %v2257 = vsel %vm123, %v2251, 0.0
    %2258 = vadd.xlane.f32.xlu0 %v2257
    %v2259 = vpop.xlane.xlu0 %2258
    %v2260 = vmul.f32 %v2256, %v130
    %v2261 = vmul.f32 %v2259, %v130
    %v2262 = vmul.f32 %v2250, %v2250
    %v2263 = vmul.f32 %v2251, %v2251
    %v2264 = vsel %vm123, %v2262, 0.0
    %2265 = vadd.xlane.f32.xlu0 %v2264
    %v2266 = vpop.xlane.xlu0 %2265
    %v2267 = vsel %vm123, %v2263, 0.0
    %2268 = vadd.xlane.f32.xlu0 %v2267
    %v2269 = vpop.xlane.xlu0 %2268
    %v2270 = vmul.f32 %v2266, %v130
    %v2271 = vmul.f32 %v2269, %v130
    %v2272 = vmul.f32 %v2260, %v2260
    %v2273 = vmul.f32 %v2261, %v2261
    %v2274 = vsub.f32 %v2270, %v2272
    %v2275 = vsub.f32 %v2271, %v2273
    %v2276 = vsub.f32 %v2250, %v2260
    %v2277 = vsub.f32 %v2251, %v2261
    %v2278 = vadd.f32 %v2274, 1e-05
    %v2279 = vadd.f32 %v2275, 1e-05
    %v2280 = vrsqrt.pop %v2278
    %v2281 = vrsqrt.pop %v2279
    %v2282 = vmul.f32 %v2276, %v2280
    %v2283 = vmul.f32 %v2277, %v2281
    %v2285 = vlaneseq
    %v2286 = vshrl.u32 %v2285, 7
    %v2287 = vsub.s32 0, %v2286
    %v2288 = vrot.slane %v2252, %v2287
    %v2290 = vmul.f32 %v2282, %v2288
    %v2291 = vmul.f32 %v2283, %v2288
    %v2293 = vlaneseq
    %v2294 = vshrl.u32 %v2293, 7
    %v2295 = vsub.s32 0, %v2294
    %v2296 = vrot.slane %v2253, %v2295
    %v2298 = vadd.f32 %v2290, %v2296
    %v2299 = vadd.f32 %v2291, %v2296
    %v2300 = vld [vmem:[%s13] sm:$0xff]
    %v2301 = vld [vmem:[%s13 + $0x8] sm:$0xff]
    %v2302 = vld [vmem:[%s13 + $0x10] sm:$0xff]
    %v2303 = vld [vmem:[%s13 + $0x18] sm:$0xff]
    %v2304 = vld [vmem:[%s14] sm:$0x1]
    %v2306 = vlaneseq
    %v2307 = vshrl.u32 %v2306, 7
    %v2308 = vsub.s32 0, %v2307
    %v2309 = vrot.slane %v2304, %v2308
    %v2312 = vsel %vm123, %v2298, 0
    %v2315 = vsel %vm123, %v2299, 0
    %2317 = vmatprep.subr.mxu0 0.0
    %2318 = vmatpush1.msra.mxu0 %v2300
    %2319 = vmatprep.subr.mxu0 0.0
    %2320 = vmatpush1.msra.mxu0 %v2301
    %2321 = vmatprep.subr.mxu0 0.0
    %2322 = vmatpush1.msra.mxu0 %v2302
    %2323 = vmatprep.subr.mxu0 0.0
    %2324 = vmatpush1.msra.mxu0 %v2303
    %2325 = vmatprep.subr.mxu0 0.0
    %2326 = vmatpush1.msra.mxu0 0.0
    %2327 = vmatprep.subr.mxu0 0.0
    %2328 = vmatpush1.msra.mxu0 0.0
    %2329 = vmatprep.subr.mxu0 0.0
    %2330 = vmatpush1.msra.mxu0 0.0
    %2331 = vmatprep.subr.mxu0 0.0
    %2332 = vmatpush1.msra.mxu0 0.0
    %2333 = vmatprep.subr.mxu0 0.0
    %2334 = vmatpush1.msra.mxu0 0.0
    %2335 = vmatprep.subr.mxu0 0.0
    %2336 = vmatpush1.msra.mxu0 0.0
    %2337 = vmatprep.subr.mxu0 0.0
    %2338 = vmatpush1.msra.mxu0 0.0
    %2339 = vmatprep.subr.mxu0 0.0
    %2340 = vmatpush1.msra.mxu0 0.0
    %2341 = vmatprep.subr.mxu0 0.0
    %2342 = vmatpush1.msra.mxu0 0.0
    %2343 = vmatprep.subr.mxu0 0.0
    %2344 = vmatpush1.msra.mxu0 0.0
    %2345 = vmatprep.subr.mxu0 0.0
    %2346 = vmatpush1.msra.mxu0 0.0
    %2347 = vmatprep.subr.mxu0 0.0
    %2348 = vmatpush1.msra.mxu0 0.0
    %2349 = vmatprep.subr.mxu0 0.0
    %2350 = vmatpush1.msra.mxu0 0.0
    %2351 = vmatprep.subr.mxu0 0.0
    %2352 = vmatpush1.msra.mxu0 0.0
    %2353 = vmatprep.subr.mxu0 0.0
    %2354 = vmatpush1.msra.mxu0 0.0
    %2355 = vmatprep.subr.mxu0 0.0
    %2356 = vmatpush1.msra.mxu0 0.0
    %2357 = vmatprep.subr.mxu0 0.0
    %2358 = vmatpush1.msra.mxu0 0.0
    %2359 = vmatprep.subr.mxu0 0.0
    %2360 = vmatpush1.msra.mxu0 0.0
    %2361 = vmatprep.subr.mxu0 0.0
    %2362 = vmatpush1.msra.mxu0 0.0
    %2363 = vmatprep.subr.mxu0 0.0
    %2364 = vmatpush1.msra.mxu0 0.0
    %2365 = vmatprep.subr.mxu0 0.0
    %2366 = vmatpush1.msra.mxu0 0.0
    %2367 = vmatprep.subr.mxu0 0.0
    %2368 = vmatpush1.msra.mxu0 0.0
    %2369 = vmatprep.subr.mxu0 0.0
    %2370 = vmatpush1.msra.mxu0 0.0
    %2371 = vmatprep.subr.mxu0 0.0
    %2372 = vmatpush1.msra.mxu0 0.0
    %2373 = vmatprep.subr.mxu0 0.0
    %2374 = vmatpush1.msra.mxu0 0.0
    %2375 = vmatprep.subr.mxu0 0.0
    %2376 = vmatpush1.msra.mxu0 0.0
    %2377 = vmatprep.subr.mxu0 0.0
    %2378 = vmatpush1.msra.mxu0 0.0
    %2379 = vmatprep.subr.mxu0 0.0
    %2380 = vmatpush1.msra.mxu0 0.0
    %2381 = vmatprep.mubr.f32.mxu0 0.0
    %2382 = vmatmul.mubr.f32.gmra.mrb[0].mxu0 %v2312
    %v2383 = vpop.f32.mrb[0].mxu0
    %v2384 = vadd.f32 %v2309, %v2383
    %v2385 = vpop.f32.mrb[0].mxu0
    %2386 = vmatprep.mubr.f32.mxu0 0.0
    %2387 = vmatmul.mubr.f32.gmra.mrb[0].mxu0 %v2315
    %v2388 = vpop.f32.mrb[0].mxu0
    %v2389 = vadd.f32 %v2309, %v2388
    %v2390 = vpop.f32.mrb[0].mxu0
    %2391 = vdwg.mxu0
    %v2392 = vmul.f32 %v2384, %v2384
    %v2393 = vmul.f32 %v2389, %v2389
    %v2394 = vmul.f32 %v2384, %v2392
    %v2395 = vmul.f32 %v2389, %v2393
    %v2396 = vmul.f32 %v2394, 0.044715
    %v2397 = vmul.f32 %v2395, 0.044715
    %v2398 = vadd.f32 %v2384, %v2396
    %v2399 = vadd.f32 %v2389, %v2397
    %v2400 = vmul.f32 %v2398, 0.7978846
    %v2401 = vmul.f32 %v2399, 0.7978846
    %v2402 = vtanh.pop %v2400
    %v2403 = vtanh.pop %v2401
    %v2404 = vadd.f32 %v2402, 1.0
    %v2405 = vadd.f32 %v2403, 1.0
    %v2406 = vmul.f32 %v2404, 0.5
    %v2407 = vmul.f32 %v2405, 0.5
    %v2408 = vmul.f32 %v2384, %v2406
    %v2409 = vmul.f32 %v2389, %v2407
    %v2410 = vld [vmem:[%s15] sm:$0xff]
    %v2411 = vld [vmem:[%s15 + $0x8] sm:$0xff]
    %v2412 = vld [vmem:[%s15 + $0x10] sm:$0xff]
    %v2413 = vld [vmem:[%s15 + $0x18] sm:$0xff]
    %v2414 = vld [vmem:[%s15 + $0x20] sm:$0xff]
    %v2415 = vld [vmem:[%s15 + $0x28] sm:$0xff]
    %v2416 = vld [vmem:[%s15 + $0x30] sm:$0xff]
    %v2417 = vld [vmem:[%s15 + $0x38] sm:$0xff]
    %v2418 = vld [vmem:[%s15 + $0x40] sm:$0xff]
    %v2419 = vld [vmem:[%s15 + $0x48] sm:$0xff]
    %v2420 = vld [vmem:[%s15 + $0x50] sm:$0xff]
    %v2421 = vld [vmem:[%s15 + $0x58] sm:$0xff]
    %v2422 = vld [vmem:[%s15 + $0x60] sm:$0xff]
    %v2423 = vld [vmem:[%s15 + $0x68] sm:$0xff]
    %v2424 = vld [vmem:[%s15 + $0x70] sm:$0xff]
    %v2425 = vld [vmem:[%s15 + $0x78] sm:$0xff]
    %v2426 = vld [vmem:[%s16] sm:$0x1]
    %v2428 = vlaneseq
    %v2429 = vshrl.u32 %v2428, 7
    %v2430 = vsub.s32 0, %v2429
    %v2431 = vrot.slane %v2426, %v2430
    %2433 = vmatprep.subr.mxu0 0.0
    %2434 = vmatpush1.msra.mxu0 %v2410
    %2435 = vmatprep.subr.mxu0 0.0
    %2436 = vmatpush1.msra.mxu0 %v2411
    %2437 = vmatprep.subr.mxu0 0.0
    %2438 = vmatpush1.msra.mxu0 %v2412
    %2439 = vmatprep.subr.mxu0 0.0
    %2440 = vmatpush1.msra.mxu0 %v2413
    %2441 = vmatprep.subr.mxu0 0.0
    %2442 = vmatpush1.msra.mxu0 %v2414
    %2443 = vmatprep.subr.mxu0 0.0
    %2444 = vmatpush1.msra.mxu0 %v2415
    %2445 = vmatprep.subr.mxu0 0.0
    %2446 = vmatpush1.msra.mxu0 %v2416
    %2447 = vmatprep.subr.mxu0 0.0
    %2448 = vmatpush1.msra.mxu0 %v2417
    %2449 = vmatprep.subr.mxu0 0.0
    %2450 = vmatpush1.msra.mxu0 %v2418
    %2451 = vmatprep.subr.mxu0 0.0
    %2452 = vmatpush1.msra.mxu0 %v2419
    %2453 = vmatprep.subr.mxu0 0.0
    %2454 = vmatpush1.msra.mxu0 %v2420
    %2455 = vmatprep.subr.mxu0 0.0
    %2456 = vmatpush1.msra.mxu0 %v2421
    %2457 = vmatprep.subr.mxu0 0.0
    %2458 = vmatpush1.msra.mxu0 %v2422
    %2459 = vmatprep.subr.mxu0 0.0
    %2460 = vmatpush1.msra.mxu0 %v2423
    %2461 = vmatprep.subr.mxu0 0.0
    %2462 = vmatpush1.msra.mxu0 %v2424
    %2463 = vmatprep.subr.mxu0 0.0
    %2464 = vmatpush1.msra.mxu0 %v2425
    %2465 = vmatprep.subr.mxu0 0.0
    %2466 = vmatpush1.msra.mxu0 0.0
    %2467 = vmatprep.subr.mxu0 0.0
    %2468 = vmatpush1.msra.mxu0 0.0
    %2469 = vmatprep.subr.mxu0 0.0
    %2470 = vmatpush1.msra.mxu0 0.0
    %2471 = vmatprep.subr.mxu0 0.0
    %2472 = vmatpush1.msra.mxu0 0.0
    %2473 = vmatprep.subr.mxu0 0.0
    %2474 = vmatpush1.msra.mxu0 0.0
    %2475 = vmatprep.subr.mxu0 0.0
    %2476 = vmatpush1.msra.mxu0 0.0
    %2477 = vmatprep.subr.mxu0 0.0
    %2478 = vmatpush1.msra.mxu0 0.0
    %2479 = vmatprep.subr.mxu0 0.0
    %2480 = vmatpush1.msra.mxu0 0.0
    %2481 = vmatprep.subr.mxu0 0.0
    %2482 = vmatpush1.msra.mxu0 0.0
    %2483 = vmatprep.subr.mxu0 0.0
    %2484 = vmatpush1.msra.mxu0 0.0
    %2485 = vmatprep.subr.mxu0 0.0
    %2486 = vmatpush1.msra.mxu0 0.0
    %2487 = vmatprep.subr.mxu0 0.0
    %2488 = vmatpush1.msra.mxu0 0.0
    %2489 = vmatprep.subr.mxu0 0.0
    %2490 = vmatpush1.msra.mxu0 0.0
    %2491 = vmatprep.subr.mxu0 0.0
    %2492 = vmatpush1.msra.mxu0 0.0
    %2493 = vmatprep.subr.mxu0 0.0
    %2494 = vmatpush1.msra.mxu0 0.0
    %2495 = vmatprep.subr.mxu0 0.0
    %2496 = vmatpush1.msra.mxu0 0.0
    %2497 = vmatprep.mubr.f32.mxu0 0.0
    %2498 = vmatmul.mubr.f32.gmra.mrb[0].mxu0 %v2408
    %v2499 = vpop.f32.mrb[0].mxu0
    %v2500 = vadd.f32 %v2431, %v2499
    %v2501 = vpop.f32.mrb[0].mxu0
    %2502 = vmatprep.mubr.f32.mxu0 0.0
    %2503 = vmatmul.mubr.f32.gmra.mrb[0].mxu0 %v2409
    %v2504 = vpop.f32.mrb[0].mxu0
    %v2505 = vadd.f32 %v2431, %v2504
    %v2506 = vpop.f32.mrb[0].mxu0
    %2507 = vdwg.mxu0
    %v2508 = vadd.f32 %v2250, %v2500
    %v2509 = vadd.f32 %v2251, %v2505
    %2510 = vst.msk [vmem:[#allocation8] sm:$0xff] %vm123, %v2508
    %2511 = vst.msk [vmem:[#allocation8 + $0x8] sm:$0xff] %vm123, %v2509
    // Predicated region
    $region82: #{tpu_custom_call.1} parent=1 // pred_check
      _
    $region83: #{tpu_custom_call.1} parent=1 // pred_check_branch
      %2513 = sbr.rel (0) target = $region85
    $region84: #{tpu_custom_call.1} parent=1 // pred_region
      %s2515 = ssub.s32 256, 256
      %2516 = vsyncadd [#allocation4], %s2515
      %s2517 = sshll.u32 [#allocation8], 4
      %s2518 = int_to_ptr.vmem [resolvable:$true] %s2517
      %2523 = dma.vmem_to_hbm [thread:$0]  %s2518, 256, %s17, [#allocation4], 128, 128, 8
    $region85: #{tpu_custom_call.1} parent=1 // pred_fallthru
      _
    // Predicated region
    $region86: #{tpu_custom_call.1} parent=1 // pred_check
      _
    $region87: #{tpu_custom_call.1} parent=1 // pred_check_branch
      %2525 = sbr.rel (0) target = $region89
    $region88: #{tpu_custom_call.1} parent=1 // pred_region
      %2526 = dma.done [#allocation4], 256
    $region89: #{tpu_custom_call.1} parent=1 // pred_fallthru
      _
    %2527 = vsyncpa [#allocation3], 1
    %2528 = vsyncpa [#allocation6], 1
    %2529 = vsyncpa [#allocation4], 1

</llo_original>
